<compile_context>
chip_gen: v7x
topology: tpu7x:2x2x1
jax: 0.10.0
libtpu: 0.0.40
codegen_flags: <defaults>
</compile_context>

<pallas_src>
import functools

import numpy as np

import jax
import jax.numpy as jnp
from jax.experimental import pallas as pl
from jax.experimental.pallas import tpu as pltpu


# ---------------------------------------------------------------------------
# Fused kernel.
#
# Lane layouts of the in-kernel activations:
#   conv1 output : (ow%2)*72 + c*12 + ow//2    (144 lanes, [even ow | odd ow])
#   pool1        : c*12 + owp                  ( 72 lanes)
#   conv2 output : (ow%2)*64 + co*4 + ow//2    (128 lanes, [even ow | odd ow])
#   pool2        : co*4 + owp                  ( 64 lanes, one slab per oh)
#   fc outputs   : padded to 128 lanes; merged out = [emb 0:84 | logits 84:94]
# ---------------------------------------------------------------------------
def _lenet_kernel(x_ref, t1_ref, b1_ref, t2_ref, b2_ref,
                  w1_ref, b1f_ref, w2_ref, b2f_ref, w3_ref, b3f_ref,
                  out_ref, p1_sc):
    tb = x_ref.shape[0]
    f32, bf16 = jnp.float32, jnp.bfloat16

    # Input arrives with rows pre-split by parity: x_ref[:, 0] = even rows,
    # x_ref[:, 1] = odd rows, each (tb, 14, 28).  Every conv1 slab is then a
    # CONTIGUOUS 12-row slice (no strided loads, no per-row scratch traffic).
    def slab1(parity, i0):
        return x_ref[:, parity, i0:i0 + 12, :].reshape(tb * 12, 28).astype(bf16)

    xe0, xe1, xe2 = slab1(0, 0), slab1(0, 1), slab1(0, 2)
    xo0, xo1, xo2 = slab1(1, 0), slab1(1, 1), slab1(1, 2)

    def c1dot(s, kh):
        return jnp.dot(s, t1_ref[kh], preferred_element_type=f32)

    # ---- conv1 (1->6, 5x5, valid): even / odd output rows ------------------
    acc_e = (c1dot(xe0, 0) + c1dot(xo0, 1) + c1dot(xe1, 2)
             + c1dot(xo1, 3) + c1dot(xe2, 4))                 # (tb*12, 144)
    acc_o = (c1dot(xo0, 0) + c1dot(xe1, 1) + c1dot(xo1, 2)
             + c1dot(xe2, 3) + c1dot(xo2, 4))
    a_e = jnp.maximum(acc_e + b1_ref[...], 0.0)               # relu
    a_o = jnp.maximum(acc_o + b1_ref[...], 0.0)

    # ---- 2x2 max-pool: H = one elementwise max, W = half-split max ---------
    m1 = jnp.maximum(a_e, a_o)                                # (tb*12, 144)
    p1 = jnp.maximum(m1[:, :72], m1[:, 72:144])               # (tb*12, 72)
    p1_sc[...] = p1.reshape(tb, 12, 72)                       # one dense store

    # ---- conv2 (6->16, 5x5, valid) ------------------------------------------
    def c2dot(kh):
        s = p1_sc[:, kh:kh + 8, :].reshape(tb * 8, 72).astype(bf16)
        return jnp.dot(s, t2_ref[kh], preferred_element_type=f32)

    acc2 = c2dot(0) + c2dot(1) + c2dot(2) + c2dot(3) + c2dot(4)
    a2 = jnp.maximum(acc2 + b2_ref[...], 0.0)                 # (tb*8, 128)

    # ---- 2x2 max-pool + fc1 as 4 partial K=64 matmuls (no lane concat) ------
    wm2 = jnp.maximum(a2[:, :64], a2[:, 64:128]).reshape(tb, 8, 64)
    h1 = b1f_ref[...]
    for oh in range(4):
        feat = jnp.maximum(wm2[:, 2 * oh, :], wm2[:, 2 * oh + 1, :])  # (tb, 64)
        h1 = h1 + jnp.dot(feat.astype(bf16), w1_ref[oh],
                          preferred_element_type=f32)
    h1 = jnp.maximum(h1, 0.0)                                 # (tb, 128); dropout1 = id

    h2 = jnp.maximum(
        jnp.dot(h1.astype(bf16), w2_ref[...], preferred_element_type=f32)
        + b2f_ref[...], 0.0)                                  # (tb, 128); dropout2 = id

    # Merged lane-dense output: h2 (emb) occupies lanes 0:84 and is exactly 0
    # elsewhere; fc3 (weights packed into cols 84:94) adds the logits there.
    out_ref[...] = (h2
                    + jnp.dot(h2.astype(bf16), w3_ref[...],
                              preferred_element_type=f32)
                    + b3f_ref[...])


# ---------------------------------------------------------------------------
# Wrapper: grid / BlockSpecs
# ---------------------------------------------------------------------------
_DEFAULT_TILE_BATCH = 64   # tunable; biggest lever for large-batch throughput


def _vmem_limit_bytes():
    cap = 128 * 1024 * 1024
    try:
        cap = int(pltpu.get_tpu_info().vmem_capacity_bytes)
    except Exception:
        pass
    # ~75% of physical VMEM, capped: v5e/v6e -> 96 MiB, v7x (64 MiB/TC) -> 48 MiB.
    return int(min(96 * 1024 * 1024, cap * 3 // 4))


def _resident(shape):
    """BlockSpec for a weight that stays VMEM-resident for the whole grid."""
    nd = len(shape)
    return pl.BlockSpec(shape, lambda i, _nd=nd: (0,) * _nd)


@functools.partial(jax.jit, static_argnums=(2,))
def _fused_forward(packed, x_b2828, tb):
    B = x_b2828.shape[0]
    Bp = -(-B // tb) * tb
    x = x_b2828
    if Bp != B:
        x = jnp.pad(x, ((0, Bp - B), (0, 0), (0, 0)))
    # Pre-split input rows by parity so conv1's fused H-pool only needs
    # contiguous slabs in the kernel: x_eo[:, 0] = even rows, [:, 1] = odd.
    x_eo = jnp.transpose(x.reshape(Bp, 14, 2, 28), (0, 2, 1, 3))  # (Bp,2,14,28)

    out = pl.pallas_call(
        _lenet_kernel,
        out_shape=jax.ShapeDtypeStruct((Bp, 128), jnp.float32),
        grid=(Bp // tb,),
        in_specs=[
            pl.BlockSpec((tb, 2, 14, 28), lambda i: (i, 0, 0, 0)),  # input tile
            _resident((5, 28, 144)),    # conv1 Toeplitz (bf16, cols [even|odd])
            _resident((1, 144)),        # conv1 bias (f32, per column)
            _resident((5, 72, 128)),    # conv2 Toeplitz (bf16, cols [even|odd])
            _resident((1, 128)),        # conv2 bias
            _resident((4, 64, 128)),    # fc1 weight, split per pooled-H row
            _resident((1, 128)),        # fc1 bias
            _resident((128, 128)),      # fc2 weight
            _resident((1, 128)),        # fc2 bias
            _resident((128, 128)),      # fc3 weight (rows 0:84 -> cols 84:94)
            _resident((1, 128)),        # fc3 bias (lanes 84:94)
        ],
        out_specs=pl.BlockSpec((tb, 128), lambda i: (i, 0)),
        scratch_shapes=[pltpu.VMEM((tb, 12, 72), jnp.float32)],    # pool1 output
        compiler_params=pltpu.CompilerParams(
            dimension_semantics=("parallel",),
            vmem_limit_bytes=_vmem_limit_bytes()),
    )(x_eo, packed["t1"], packed["b1"], packed["t2"], packed["b2"],
      packed["w1"], packed["fb1"], packed["w2"], packed["fb2"],
      packed["w3"], packed["fb3"])
    return out[:B, :84], out[:B, 84:94]


def net_forward(packed, x_nchw, embed=False, tile_batch=_DEFAULT_TILE_BATCH):
    """Mirrors Net.forward (eval mode).  x_nchw: (B, 1, 28, 28) float32."""
    B = x_nchw.shape[0]
    x = x_nchw.reshape(B, 28, 28).astype(jnp.float32)
    tb = int(min(tile_batch, B))
    embedding, logits = _fused_forward(packed, x, tb)
    return embedding if embed else logits


# ---------------------------------------------------------------------------
# Parameters: PyTorch-convention init + one-time packing into kernel layouts
# ---------------------------------------------------------------------------
def init_params(key):
    def uniform(k, shape, fan_in):
        bound = 1.0 / jnp.sqrt(float(fan_in))
        return jax.random.uniform(k, shape, jnp.float32, -bound, bound)

    keys = jax.random.split(key, 10)
    return {
        "conv1_w": uniform(keys[0], (6, 1, 5, 5), 1 * 5 * 5),
        "conv1_b": uniform(keys[1], (6,), 1 * 5 * 5),
        "conv2_w": uniform(keys[2], (16, 6, 5, 5), 6 * 5 * 5),
        "conv2_b": uniform(keys[3], (16,), 6 * 5 * 5),
        "fc1_w": uniform(keys[4], (120, 16 * 4 * 4), 16 * 4 * 4),
        "fc1_b": uniform(keys[5], (120,), 16 * 4 * 4),
        "fc2_w": uniform(keys[6], (84, 120), 120),
        "fc2_b": uniform(keys[7], (84,), 120),
        "fc3_w": uniform(keys[8], (10, 84), 84),
        "fc3_b": uniform(keys[9], (10,), 84),
    }


def pack_params(params):
    """One-time packing of PyTorch-convention weights into the kernel layouts."""
    w1 = np.asarray(params["conv1_w"], np.float32)    # (6, 1, 5, 5)
    b1 = np.asarray(params["conv1_b"], np.float32)
    w2 = np.asarray(params["conv2_w"], np.float32)    # (16, 6, 5, 5)
    b2 = np.asarray(params["conv2_b"], np.float32)
    fw1 = np.asarray(params["fc1_w"], np.float32)     # (120, 256)
    fb1 = np.asarray(params["fc1_b"], np.float32)
    fw2 = np.asarray(params["fc2_w"], np.float32)     # (84, 120)
    fb2 = np.asarray(params["fc2_b"], np.float32)
    fw3 = np.asarray(params["fc3_w"], np.float32)     # (10, 84)
    fb3 = np.asarray(params["fc3_b"], np.float32)

    # conv1 Toeplitz; output columns permuted so even/odd output widths land in
    # lanes [0:72] / [72:144]:  col(c, ow) = (ow % 2)*72 + c*12 + ow//2.
    t1 = np.zeros((5, 28, 144), np.float32)
    for kh in range(5):
        for kw in range(5):
            for ow in range(24):
                cols = (ow % 2) * 72 + np.arange(6) * 12 + ow // 2
                t1[kh, ow + kw, cols] = w1[:, 0, kh, kw]
    b1c = np.tile(np.repeat(b1, 12), 2)[None, :]       # (1, 144)

    # conv2 Toeplitz; rows ci*12 + iw, cols (ow % 2)*64 + co*4 + ow//2.
    t2 = np.zeros((5, 72, 128), np.float32)
    for kh in range(5):
        for kw in range(5):
            for ow in range(8):
                rows = np.arange(6) * 12 + ow + kw
                cols = (ow % 2) * 64 + np.arange(16) * 4 + ow // 2
                t2[kh, rows[:, None], cols[None, :]] = w2[:, :, kh, kw].T
    b2c = np.tile(np.repeat(b2, 4), 2)[None, :]        # (1, 128)

    # fc1 split per pooled-H row: torch flatten index = co*16 + oh*4 + ow,
    # kernel feature order inside each oh-slab = co*4 + ow.
    w1k = fw1.T.reshape(16, 4, 4, 120)                 # (co, oh, ow, out)
    w1s = np.zeros((4, 64, 128), np.float32)
    for oh in range(4):
        w1s[oh, :, :120] = w1k[:, oh, :, :].reshape(64, 120)
    fb1p = np.zeros((1, 128), np.float32); fb1p[0, :120] = fb1

    w2p = np.zeros((128, 128), np.float32); w2p[:120, :84] = fw2.T
    fb2p = np.zeros((1, 128), np.float32); fb2p[0, :84] = fb2
    # fc3 writes its logits into lanes 84:94 of the merged (emb | logits) output.
    w3p = np.zeros((128, 128), np.float32); w3p[:84, 84:94] = fw3.T
    fb3p = np.zeros((1, 128), np.float32); fb3p[0, 84:94] = fb3

    bf16, f32 = jnp.bfloat16, jnp.float32
    return dict(
        t1=jnp.asarray(t1, bf16), b1=jnp.asarray(b1c, f32),
        t2=jnp.asarray(t2, bf16), b2=jnp.asarray(b2c, f32),
        w1=jnp.asarray(w1s, bf16), fb1=jnp.asarray(fb1p, f32),
        w2=jnp.asarray(w2p, bf16), fb2=jnp.asarray(fb2p, f32),
        w3=jnp.asarray(w3p, bf16), fb3=jnp.asarray(fb3p, f32))


# ---------------------------------------------------------------------------
# Pure-JAX (XLA, f32) reference used only for the in-script numerical check
# ---------------------------------------------------------------------------
def _reference_forward(params, x_nchw, embed=False):
    hp = jax.lax.Precision.HIGHEST
    x = jnp.transpose(x_nchw.astype(jnp.float32), (0, 2, 3, 1))   # NHWC

    def conv_relu(v, w, b):
        out = jax.lax.conv_general_dilated(
            v, jnp.transpose(w, (2, 3, 1, 0)), window_strides=(1, 1),
            padding="VALID", dimension_numbers=("NHWC", "HWIO", "NHWC"),
            precision=hp)
        return jnp.maximum(out + b, 0.0)

    def pool(v):
        B, H, W, C = v.shape
        return v.reshape(B, H // 2, 2, W // 2, 2, C).max(axis=(2, 4))

    v = pool(conv_relu(x, params["conv1_w"], params["conv1_b"]))
    v = pool(conv_relu(v, params["conv2_w"], params["conv2_b"]))
    B = v.shape[0]
    v = jnp.transpose(v, (0, 3, 1, 2)).reshape(B, 256)            # torch (C,H,W) flatten
    h1 = jnp.maximum(jnp.dot(v, params["fc1_w"].T, precision=hp) + params["fc1_b"], 0.0)
    emb = jnp.maximum(jnp.dot(h1, params["fc2_w"].T, precision=hp) + params["fc2_b"], 0.0)
    if embed:
        return emb
    return jnp.dot(emb, params["fc3_w"].T, precision=hp) + params["fc3_b"]


if __name__ == "__main__":
    key = jax.random.PRNGKey(0)
    pkey, xkey, xkey2 = jax.random.split(key, 3)
    params = init_params(pkey)
    packed = pack_params(params)

    # Shape implied by fc1 (16*4*4): input must be (B, 1, 28, 28).
    x = jax.random.normal(xkey, (2, 1, 28, 28), jnp.float32)
    logits = net_forward(packed, x, embed=False)
    embedding = net_forward(packed, x, embed=True)
    jax.block_until_ready((logits, embedding))

    assert logits.shape == (2, 10) and logits.dtype == jnp.float32
    assert embedding.shape == (2, 84) and embedding.dtype == jnp.float32

    # Tolerance 4e-2: kernel uses bf16 MXU operands with f32 accumulation.
    ref_logits = _reference_forward(params, x, embed=False)
    ref_emb = _reference_forward(params, x, embed=True)
    err = max(float(jnp.max(jnp.abs(logits - ref_logits))),
              float(jnp.max(jnp.abs(embedding - ref_emb))))
    assert err < 4e-2, f"numerical mismatch vs XLA reference: max|diff| = {err}"

    # Larger batch: exercises the multi-step 'parallel' grid and batch padding.
    xb = jax.random.normal(xkey2, (100, 1, 28, 28), jnp.float32)
    logits_b = net_forward(packed, xb, embed=False)
    jax.block_until_ready(logits_b)
    assert logits_b.shape == (100, 10)
    ref_b = _reference_forward(params, xb, embed=False)
    err_b = float(jnp.max(jnp.abs(logits_b - ref_b)))
    assert err_b < 4e-2, f"numerical mismatch (batch=100): max|diff| = {err_b}"

    print("KERNEL_OK")
</pallas_src>

<mosaic_0001>
module attributes {stable_mosaic.version = 11 : i64} {
  func.func @_lenet_kernel(%arg0: i32, %arg1: memref<2x2x14x28xf32, #tpu.memory_space<vmem>>, %arg2: memref<5x28x144xbf16, #tpu.memory_space<vmem>>, %arg3: memref<1x144xf32, #tpu.memory_space<vmem>>, %arg4: memref<5x72x128xbf16, #tpu.memory_space<vmem>>, %arg5: memref<1x128xf32, #tpu.memory_space<vmem>>, %arg6: memref<4x64x128xbf16, #tpu.memory_space<vmem>>, %arg7: memref<1x128xf32, #tpu.memory_space<vmem>>, %arg8: memref<128x128xbf16, #tpu.memory_space<vmem>>, %arg9: memref<1x128xf32, #tpu.memory_space<vmem>>, %arg10: memref<128x128xbf16, #tpu.memory_space<vmem>>, %arg11: memref<1x128xf32, #tpu.memory_space<vmem>>, %arg12: memref<2x128xf32, #tpu.memory_space<vmem>>, %arg13: memref<2x12x72xf32, #tpu.memory_space<vmem>>) attributes {dimension_semantics = [#tpu.dimension_semantics<parallel>], iteration_bounds = array<i64: 1>, scalar_prefetch = 0 : i64, scratch_operands = 1 : i64, tpu.core_type = #tpu.core_type<tc>, window_params = [{transform_indices = @transform_0, window_bounds = array<i64: 2, 2, 14, 28>}, {pipeline_mode = #tpu.pipeline_mode<synchronous>, transform_indices = @transform_1, window_bounds = array<i64: 5, 28, 144>}, {pipeline_mode = #tpu.pipeline_mode<synchronous>, transform_indices = @transform_2, window_bounds = array<i64: 1, 144>}, {pipeline_mode = #tpu.pipeline_mode<synchronous>, transform_indices = @transform_3, window_bounds = array<i64: 5, 72, 128>}, {pipeline_mode = #tpu.pipeline_mode<synchronous>, transform_indices = @transform_4, window_bounds = array<i64: 1, 128>}, {pipeline_mode = #tpu.pipeline_mode<synchronous>, transform_indices = @transform_5, window_bounds = array<i64: 4, 64, 128>}, {pipeline_mode = #tpu.pipeline_mode<synchronous>, transform_indices = @transform_6, window_bounds = array<i64: 1, 128>}, {pipeline_mode = #tpu.pipeline_mode<synchronous>, transform_indices = @transform_7, window_bounds = array<i64: 128, 128>}, {pipeline_mode = #tpu.pipeline_mode<synchronous>, transform_indices = @transform_8, window_bounds = array<i64: 1, 128>}, {pipeline_mode = #tpu.pipeline_mode<synchronous>, transform_indices = @transform_9, window_bounds = array<i64: 128, 128>}, {pipeline_mode = #tpu.pipeline_mode<synchronous>, transform_indices = @transform_10, window_bounds = array<i64: 1, 128>}, {transform_indices = @transform_11, window_bounds = array<i64: 2, 128>}]} {
    %c0 = arith.constant 0 : index
    %c0_0 = arith.constant 0 : index
    %c0_1 = arith.constant 0 : index
    %c0_2 = arith.constant 0 : index
    %0 = vector.load %arg1[%c0, %c0_0, %c0_1, %c0_2] : memref<2x2x14x28xf32, #tpu.memory_space<vmem>>, vector<2x1x12x28xf32>
    %1 = vector.shape_cast %0 : vector<2x1x12x28xf32> to vector<2x12x28xf32>
    %2 = vector.shape_cast %1 : vector<2x12x28xf32> to vector<24x28xf32>
    %3 = arith.truncf %2 : vector<24x28xf32> to vector<24x28xbf16>
    %c0_3 = arith.constant 0 : index
    %c0_4 = arith.constant 0 : index
    %c1 = arith.constant 1 : index
    %c0_5 = arith.constant 0 : index
    %4 = vector.load %arg1[%c0_3, %c0_4, %c1, %c0_5] : memref<2x2x14x28xf32, #tpu.memory_space<vmem>>, vector<2x1x12x28xf32>
    %5 = vector.shape_cast %4 : vector<2x1x12x28xf32> to vector<2x12x28xf32>
    %6 = vector.shape_cast %5 : vector<2x12x28xf32> to vector<24x28xf32>
    %7 = arith.truncf %6 : vector<24x28xf32> to vector<24x28xbf16>
    %c0_6 = arith.constant 0 : index
    %c0_7 = arith.constant 0 : index
    %c2 = arith.constant 2 : index
    %c0_8 = arith.constant 0 : index
    %8 = vector.load %arg1[%c0_6, %c0_7, %c2, %c0_8] : memref<2x2x14x28xf32, #tpu.memory_space<vmem>>, vector<2x1x12x28xf32>
    %9 = vector.shape_cast %8 : vector<2x1x12x28xf32> to vector<2x12x28xf32>
    %10 = vector.shape_cast %9 : vector<2x12x28xf32> to vector<24x28xf32>
    %11 = arith.truncf %10 : vector<24x28xf32> to vector<24x28xbf16>
    %c0_9 = arith.constant 0 : index
    %c1_10 = arith.constant 1 : index
    %c0_11 = arith.constant 0 : index
    %c0_12 = arith.constant 0 : index
    %12 = vector.load %arg1[%c0_9, %c1_10, %c0_11, %c0_12] : memref<2x2x14x28xf32, #tpu.memory_space<vmem>>, vector<2x1x12x28xf32>
    %13 = vector.shape_cast %12 : vector<2x1x12x28xf32> to vector<2x12x28xf32>
    %14 = vector.shape_cast %13 : vector<2x12x28xf32> to vector<24x28xf32>
    %15 = arith.truncf %14 : vector<24x28xf32> to vector<24x28xbf16>
    %c0_13 = arith.constant 0 : index
    %c1_14 = arith.constant 1 : index
    %c1_15 = arith.constant 1 : index
    %c0_16 = arith.constant 0 : index
    %16 = vector.load %arg1[%c0_13, %c1_14, %c1_15, %c0_16] : memref<2x2x14x28xf32, #tpu.memory_space<vmem>>, vector<2x1x12x28xf32>
    %17 = vector.shape_cast %16 : vector<2x1x12x28xf32> to vector<2x12x28xf32>
    %18 = vector.shape_cast %17 : vector<2x12x28xf32> to vector<24x28xf32>
    %19 = arith.truncf %18 : vector<24x28xf32> to vector<24x28xbf16>
    %c0_17 = arith.constant 0 : index
    %c1_18 = arith.constant 1 : index
    %c2_19 = arith.constant 2 : index
    %c0_20 = arith.constant 0 : index
    %20 = vector.load %arg1[%c0_17, %c1_18, %c2_19, %c0_20] : memref<2x2x14x28xf32, #tpu.memory_space<vmem>>, vector<2x1x12x28xf32>
    %21 = vector.shape_cast %20 : vector<2x1x12x28xf32> to vector<2x12x28xf32>
    %22 = vector.shape_cast %21 : vector<2x12x28xf32> to vector<24x28xf32>
    %23 = arith.truncf %22 : vector<24x28xf32> to vector<24x28xbf16>
    %c0_21 = arith.constant 0 : index
    %c0_22 = arith.constant 0 : index
    %c0_23 = arith.constant 0 : index
    %24 = vector.load %arg2[%c0_21, %c0_22, %c0_23] : memref<5x28x144xbf16, #tpu.memory_space<vmem>>, vector<1x28x144xbf16>
    %25 = vector.shape_cast %24 : vector<1x28x144xbf16> to vector<28x144xbf16>
    %cst = arith.constant dense<0.000000e+00> : vector<24x144xf32>
    %26 = tpu.matmul %3, %25, %cst {dimension_numbers = #tpu.dot_dimension_numbers<[1], [0], [0], [1], [0, 0, 1, 1], [], []>} : vector<24x28xbf16>, vector<28x144xbf16>, vector<24x144xf32> -> vector<24x144xf32>
    %c1_24 = arith.constant 1 : index
    %c0_25 = arith.constant 0 : index
    %c0_26 = arith.constant 0 : index
    %27 = vector.load %arg2[%c1_24, %c0_25, %c0_26] : memref<5x28x144xbf16, #tpu.memory_space<vmem>>, vector<1x28x144xbf16>
    %28 = vector.shape_cast %27 : vector<1x28x144xbf16> to vector<28x144xbf16>
    %cst_27 = arith.constant dense<0.000000e+00> : vector<24x144xf32>
    %29 = tpu.matmul %15, %28, %cst_27 {dimension_numbers = #tpu.dot_dimension_numbers<[1], [0], [0], [1], [0, 0, 1, 1], [], []>} : vector<24x28xbf16>, vector<28x144xbf16>, vector<24x144xf32> -> vector<24x144xf32>
    %30 = arith.addf %26, %29 : vector<24x144xf32>
    %c2_28 = arith.constant 2 : index
    %c0_29 = arith.constant 0 : index
    %c0_30 = arith.constant 0 : index
    %31 = vector.load %arg2[%c2_28, %c0_29, %c0_30] : memref<5x28x144xbf16, #tpu.memory_space<vmem>>, vector<1x28x144xbf16>
    %32 = vector.shape_cast %31 : vector<1x28x144xbf16> to vector<28x144xbf16>
    %cst_31 = arith.constant dense<0.000000e+00> : vector<24x144xf32>
    %33 = tpu.matmul %7, %32, %cst_31 {dimension_numbers = #tpu.dot_dimension_numbers<[1], [0], [0], [1], [0, 0, 1, 1], [], []>} : vector<24x28xbf16>, vector<28x144xbf16>, vector<24x144xf32> -> vector<24x144xf32>
    %34 = arith.addf %30, %33 : vector<24x144xf32>
    %c3 = arith.constant 3 : index
    %c0_32 = arith.constant 0 : index
    %c0_33 = arith.constant 0 : index
    %35 = vector.load %arg2[%c3, %c0_32, %c0_33] : memref<5x28x144xbf16, #tpu.memory_space<vmem>>, vector<1x28x144xbf16>
    %36 = vector.shape_cast %35 : vector<1x28x144xbf16> to vector<28x144xbf16>
    %cst_34 = arith.constant dense<0.000000e+00> : vector<24x144xf32>
    %37 = tpu.matmul %19, %36, %cst_34 {dimension_numbers = #tpu.dot_dimension_numbers<[1], [0], [0], [1], [0, 0, 1, 1], [], []>} : vector<24x28xbf16>, vector<28x144xbf16>, vector<24x144xf32> -> vector<24x144xf32>
    %38 = arith.addf %34, %37 : vector<24x144xf32>
    %c4 = arith.constant 4 : index
    %c0_35 = arith.constant 0 : index
    %c0_36 = arith.constant 0 : index
    %39 = vector.load %arg2[%c4, %c0_35, %c0_36] : memref<5x28x144xbf16, #tpu.memory_space<vmem>>, vector<1x28x144xbf16>
    %40 = vector.shape_cast %39 : vector<1x28x144xbf16> to vector<28x144xbf16>
    %cst_37 = arith.constant dense<0.000000e+00> : vector<24x144xf32>
    %41 = tpu.matmul %11, %40, %cst_37 {dimension_numbers = #tpu.dot_dimension_numbers<[1], [0], [0], [1], [0, 0, 1, 1], [], []>} : vector<24x28xbf16>, vector<28x144xbf16>, vector<24x144xf32> -> vector<24x144xf32>
    %42 = arith.addf %38, %41 : vector<24x144xf32>
    %c0_38 = arith.constant 0 : index
    %c0_39 = arith.constant 0 : index
    %c0_40 = arith.constant 0 : index
    %43 = vector.load %arg2[%c0_38, %c0_39, %c0_40] : memref<5x28x144xbf16, #tpu.memory_space<vmem>>, vector<1x28x144xbf16>
    %44 = vector.shape_cast %43 : vector<1x28x144xbf16> to vector<28x144xbf16>
    %cst_41 = arith.constant dense<0.000000e+00> : vector<24x144xf32>
    %45 = tpu.matmul %15, %44, %cst_41 {dimension_numbers = #tpu.dot_dimension_numbers<[1], [0], [0], [1], [0, 0, 1, 1], [], []>} : vector<24x28xbf16>, vector<28x144xbf16>, vector<24x144xf32> -> vector<24x144xf32>
    %c1_42 = arith.constant 1 : index
    %c0_43 = arith.constant 0 : index
    %c0_44 = arith.constant 0 : index
    %46 = vector.load %arg2[%c1_42, %c0_43, %c0_44] : memref<5x28x144xbf16, #tpu.memory_space<vmem>>, vector<1x28x144xbf16>
    %47 = vector.shape_cast %46 : vector<1x28x144xbf16> to vector<28x144xbf16>
    %cst_45 = arith.constant dense<0.000000e+00> : vector<24x144xf32>
    %48 = tpu.matmul %7, %47, %cst_45 {dimension_numbers = #tpu.dot_dimension_numbers<[1], [0], [0], [1], [0, 0, 1, 1], [], []>} : vector<24x28xbf16>, vector<28x144xbf16>, vector<24x144xf32> -> vector<24x144xf32>
    %49 = arith.addf %45, %48 : vector<24x144xf32>
    %c2_46 = arith.constant 2 : index
    %c0_47 = arith.constant 0 : index
    %c0_48 = arith.constant 0 : index
    %50 = vector.load %arg2[%c2_46, %c0_47, %c0_48] : memref<5x28x144xbf16, #tpu.memory_space<vmem>>, vector<1x28x144xbf16>
    %51 = vector.shape_cast %50 : vector<1x28x144xbf16> to vector<28x144xbf16>
    %cst_49 = arith.constant dense<0.000000e+00> : vector<24x144xf32>
    %52 = tpu.matmul %19, %51, %cst_49 {dimension_numbers = #tpu.dot_dimension_numbers<[1], [0], [0], [1], [0, 0, 1, 1], [], []>} : vector<24x28xbf16>, vector<28x144xbf16>, vector<24x144xf32> -> vector<24x144xf32>
    %53 = arith.addf %49, %52 : vector<24x144xf32>
    %c3_50 = arith.constant 3 : index
    %c0_51 = arith.constant 0 : index
    %c0_52 = arith.constant 0 : index
    %54 = vector.load %arg2[%c3_50, %c0_51, %c0_52] : memref<5x28x144xbf16, #tpu.memory_space<vmem>>, vector<1x28x144xbf16>
    %55 = vector.shape_cast %54 : vector<1x28x144xbf16> to vector<28x144xbf16>
    %cst_53 = arith.constant dense<0.000000e+00> : vector<24x144xf32>
    %56 = tpu.matmul %11, %55, %cst_53 {dimension_numbers = #tpu.dot_dimension_numbers<[1], [0], [0], [1], [0, 0, 1, 1], [], []>} : vector<24x28xbf16>, vector<28x144xbf16>, vector<24x144xf32> -> vector<24x144xf32>
    %57 = arith.addf %53, %56 : vector<24x144xf32>
    %c4_54 = arith.constant 4 : index
    %c0_55 = arith.constant 0 : index
    %c0_56 = arith.constant 0 : index
    %58 = vector.load %arg2[%c4_54, %c0_55, %c0_56] : memref<5x28x144xbf16, #tpu.memory_space<vmem>>, vector<1x28x144xbf16>
    %59 = vector.shape_cast %58 : vector<1x28x144xbf16> to vector<28x144xbf16>
    %cst_57 = arith.constant dense<0.000000e+00> : vector<24x144xf32>
    %60 = tpu.matmul %23, %59, %cst_57 {dimension_numbers = #tpu.dot_dimension_numbers<[1], [0], [0], [1], [0, 0, 1, 1], [], []>} : vector<24x28xbf16>, vector<28x144xbf16>, vector<24x144xf32> -> vector<24x144xf32>
    %61 = arith.addf %57, %60 : vector<24x144xf32>
    %c0_58 = arith.constant 0 : index
    %c0_59 = arith.constant 0 : index
    %62 = vector.load %arg3[%c0_58, %c0_59] : memref<1x144xf32, #tpu.memory_space<vmem>>, vector<1x144xf32>
    %63 = vector.broadcast %62 : vector<1x144xf32> to vector<24x144xf32>
    %64 = arith.addf %42, %63 : vector<24x144xf32>
    %cst_60 = arith.constant 0.000000e+00 : f32
    %65 = vector.broadcast %cst_60 : f32 to vector<24x144xf32>
    %66 = arith.maximumf %64, %65 : vector<24x144xf32>
    %c0_61 = arith.constant 0 : index
    %c0_62 = arith.constant 0 : index
    %67 = vector.load %arg3[%c0_61, %c0_62] : memref<1x144xf32, #tpu.memory_space<vmem>>, vector<1x144xf32>
    %68 = vector.broadcast %67 : vector<1x144xf32> to vector<24x144xf32>
    %69 = arith.addf %61, %68 : vector<24x144xf32>
    %cst_63 = arith.constant 0.000000e+00 : f32
    %70 = vector.broadcast %cst_63 : f32 to vector<24x144xf32>
    %71 = arith.maximumf %69, %70 : vector<24x144xf32>
    %72 = arith.maximumf %66, %71 : vector<24x144xf32>
    %73 = vector.extract_strided_slice %72 {offsets = [0, 0], sizes = [24, 72], strides = [1, 1]} : vector<24x144xf32> to vector<24x72xf32>
    %74 = vector.extract_strided_slice %72 {offsets = [0, 72], sizes = [24, 72], strides = [1, 1]} : vector<24x144xf32> to vector<24x72xf32>
    %75 = arith.maximumf %73, %74 : vector<24x72xf32>
    %76 = vector.shape_cast %75 : vector<24x72xf32> to vector<2x12x72xf32>
    %c0_64 = arith.constant 0 : index
    %c0_65 = arith.constant 0 : index
    %c0_66 = arith.constant 0 : index
    %77 = vector.load %arg13[%c0_64, %c0_65, %c0_66] : memref<2x12x72xf32, #tpu.memory_space<vmem>>, vector<2x12x72xf32>
    tpu.vector_store %arg13[%c0_64, %c0_65, %c0_66], %76 {strides = array<i32>} : memref<2x12x72xf32, #tpu.memory_space<vmem>>, vector<2x12x72xf32>,
    %c0_67 = arith.constant 0 : index
    %c0_68 = arith.constant 0 : index
    %c0_69 = arith.constant 0 : index
    %78 = vector.load %arg13[%c0_67, %c0_68, %c0_69] : memref<2x12x72xf32, #tpu.memory_space<vmem>>, vector<2x8x72xf32>
    %79 = vector.shape_cast %78 : vector<2x8x72xf32> to vector<16x72xf32>
    %80 = arith.truncf %79 : vector<16x72xf32> to vector<16x72xbf16>
    %c0_70 = arith.constant 0 : index
    %c0_71 = arith.constant 0 : index
    %c0_72 = arith.constant 0 : index
    %81 = vector.load %arg4[%c0_70, %c0_71, %c0_72] : memref<5x72x128xbf16, #tpu.memory_space<vmem>>, vector<1x72x128xbf16>
    %82 = vector.shape_cast %81 : vector<1x72x128xbf16> to vector<72x128xbf16>
    %cst_73 = arith.constant dense<0.000000e+00> : vector<16x128xf32>
    %83 = tpu.matmul %80, %82, %cst_73 {dimension_numbers = #tpu.dot_dimension_numbers<[1], [0], [0], [1], [0, 0, 1, 1], [], []>} : vector<16x72xbf16>, vector<72x128xbf16>, vector<16x128xf32> -> vector<16x128xf32>
    %c0_74 = arith.constant 0 : index
    %c1_75 = arith.constant 1 : index
    %c0_76 = arith.constant 0 : index
    %84 = vector.load %arg13[%c0_74, %c1_75, %c0_76] : memref<2x12x72xf32, #tpu.memory_space<vmem>>, vector<2x8x72xf32>
    %85 = vector.shape_cast %84 : vector<2x8x72xf32> to vector<16x72xf32>
    %86 = arith.truncf %85 : vector<16x72xf32> to vector<16x72xbf16>
    %c1_77 = arith.constant 1 : index
    %c0_78 = arith.constant 0 : index
    %c0_79 = arith.constant 0 : index
    %87 = vector.load %arg4[%c1_77, %c0_78, %c0_79] : memref<5x72x128xbf16, #tpu.memory_space<vmem>>, vector<1x72x128xbf16>
    %88 = vector.shape_cast %87 : vector<1x72x128xbf16> to vector<72x128xbf16>
    %cst_80 = arith.constant dense<0.000000e+00> : vector<16x128xf32>
    %89 = tpu.matmul %86, %88, %cst_80 {dimension_numbers = #tpu.dot_dimension_numbers<[1], [0], [0], [1], [0, 0, 1, 1], [], []>} : vector<16x72xbf16>, vector<72x128xbf16>, vector<16x128xf32> -> vector<16x128xf32>
    %90 = arith.addf %83, %89 : vector<16x128xf32>
    %c0_81 = arith.constant 0 : index
    %c2_82 = arith.constant 2 : index
    %c0_83 = arith.constant 0 : index
    %91 = vector.load %arg13[%c0_81, %c2_82, %c0_83] : memref<2x12x72xf32, #tpu.memory_space<vmem>>, vector<2x8x72xf32>
    %92 = vector.shape_cast %91 : vector<2x8x72xf32> to vector<16x72xf32>
    %93 = arith.truncf %92 : vector<16x72xf32> to vector<16x72xbf16>
    %c2_84 = arith.constant 2 : index
    %c0_85 = arith.constant 0 : index
    %c0_86 = arith.constant 0 : index
    %94 = vector.load %arg4[%c2_84, %c0_85, %c0_86] : memref<5x72x128xbf16, #tpu.memory_space<vmem>>, vector<1x72x128xbf16>
    %95 = vector.shape_cast %94 : vector<1x72x128xbf16> to vector<72x128xbf16>
    %cst_87 = arith.constant dense<0.000000e+00> : vector<16x128xf32>
    %96 = tpu.matmul %93, %95, %cst_87 {dimension_numbers = #tpu.dot_dimension_numbers<[1], [0], [0], [1], [0, 0, 1, 1], [], []>} : vector<16x72xbf16>, vector<72x128xbf16>, vector<16x128xf32> -> vector<16x128xf32>
    %97 = arith.addf %90, %96 : vector<16x128xf32>
    %c0_88 = arith.constant 0 : index
    %c3_89 = arith.constant 3 : index
    %c0_90 = arith.constant 0 : index
    %98 = vector.load %arg13[%c0_88, %c3_89, %c0_90] : memref<2x12x72xf32, #tpu.memory_space<vmem>>, vector<2x8x72xf32>
    %99 = vector.shape_cast %98 : vector<2x8x72xf32> to vector<16x72xf32>
    %100 = arith.truncf %99 : vector<16x72xf32> to vector<16x72xbf16>
    %c3_91 = arith.constant 3 : index
    %c0_92 = arith.constant 0 : index
    %c0_93 = arith.constant 0 : index
    %101 = vector.load %arg4[%c3_91, %c0_92, %c0_93] : memref<5x72x128xbf16, #tpu.memory_space<vmem>>, vector<1x72x128xbf16>
    %102 = vector.shape_cast %101 : vector<1x72x128xbf16> to vector<72x128xbf16>
    %cst_94 = arith.constant dense<0.000000e+00> : vector<16x128xf32>
    %103 = tpu.matmul %100, %102, %cst_94 {dimension_numbers = #tpu.dot_dimension_numbers<[1], [0], [0], [1], [0, 0, 1, 1], [], []>} : vector<16x72xbf16>, vector<72x128xbf16>, vector<16x128xf32> -> vector<16x128xf32>
    %104 = arith.addf %97, %103 : vector<16x128xf32>
    %c0_95 = arith.constant 0 : index
    %c4_96 = arith.constant 4 : index
    %c0_97 = arith.constant 0 : index
    %105 = vector.load %arg13[%c0_95, %c4_96, %c0_97] : memref<2x12x72xf32, #tpu.memory_space<vmem>>, vector<2x8x72xf32>
    %106 = vector.shape_cast %105 : vector<2x8x72xf32> to vector<16x72xf32>
    %107 = arith.truncf %106 : vector<16x72xf32> to vector<16x72xbf16>
    %c4_98 = arith.constant 4 : index
    %c0_99 = arith.constant 0 : index
    %c0_100 = arith.constant 0 : index
    %108 = vector.load %arg4[%c4_98, %c0_99, %c0_100] : memref<5x72x128xbf16, #tpu.memory_space<vmem>>, vector<1x72x128xbf16>
    %109 = vector.shape_cast %108 : vector<1x72x128xbf16> to vector<72x128xbf16>
    %cst_101 = arith.constant dense<0.000000e+00> : vector<16x128xf32>
    %110 = tpu.matmul %107, %109, %cst_101 {dimension_numbers = #tpu.dot_dimension_numbers<[1], [0], [0], [1], [0, 0, 1, 1], [], []>} : vector<16x72xbf16>, vector<72x128xbf16>, vector<16x128xf32> -> vector<16x128xf32>
    %111 = arith.addf %104, %110 : vector<16x128xf32>
    %c0_102 = arith.constant 0 : index
    %c0_103 = arith.constant 0 : index
    %112 = vector.load %arg5[%c0_102, %c0_103] : memref<1x128xf32, #tpu.memory_space<vmem>>, vector<1x128xf32>
    %113 = vector.broadcast %112 : vector<1x128xf32> to vector<16x128xf32>
    %114 = arith.addf %111, %113 : vector<16x128xf32>
    %cst_104 = arith.constant 0.000000e+00 : f32
    %115 = vector.broadcast %cst_104 : f32 to vector<16x128xf32>
    %116 = arith.maximumf %114, %115 : vector<16x128xf32>
    %117 = vector.extract_strided_slice %116 {offsets = [0, 0], sizes = [16, 64], strides = [1, 1]} : vector<16x128xf32> to vector<16x64xf32>
    %118 = vector.extract_strided_slice %116 {offsets = [0, 64], sizes = [16, 64], strides = [1, 1]} : vector<16x128xf32> to vector<16x64xf32>
    %119 = arith.maximumf %117, %118 : vector<16x64xf32>
    %120 = vector.shape_cast %119 : vector<16x64xf32> to vector<2x8x64xf32>
    %c0_105 = arith.constant 0 : index
    %c0_106 = arith.constant 0 : index
    %121 = vector.load %arg7[%c0_105, %c0_106] : memref<1x128xf32, #tpu.memory_space<vmem>>, vector<1x128xf32>
    %122 = vector.extract_strided_slice %120 {offsets = [0, 0, 0], sizes = [2, 1, 64], strides = [1, 1, 1]} : vector<2x8x64xf32> to vector<2x1x64xf32>
    %123 = vector.shape_cast %122 : vector<2x1x64xf32> to vector<2x64xf32>
    %124 = vector.extract_strided_slice %120 {offsets = [0, 1, 0], sizes = [2, 1, 64], strides = [1, 1, 1]} : vector<2x8x64xf32> to vector<2x1x64xf32>
    %125 = vector.shape_cast %124 : vector<2x1x64xf32> to vector<2x64xf32>
    %126 = arith.maximumf %123, %125 : vector<2x64xf32>
    %127 = arith.truncf %126 : vector<2x64xf32> to vector<2x64xbf16>
    %c0_107 = arith.constant 0 : index
    %c0_108 = arith.constant 0 : index
    %c0_109 = arith.constant 0 : index
    %128 = vector.load %arg6[%c0_107, %c0_108, %c0_109] : memref<4x64x128xbf16, #tpu.memory_space<vmem>>, vector<1x64x128xbf16>
    %129 = vector.shape_cast %128 : vector<1x64x128xbf16> to vector<64x128xbf16>
    %cst_110 = arith.constant dense<0.000000e+00> : vector<2x128xf32>
    %130 = tpu.matmul %127, %129, %cst_110 {dimension_numbers = #tpu.dot_dimension_numbers<[1], [0], [0], [1], [0, 0, 1, 1], [], []>} : vector<2x64xbf16>, vector<64x128xbf16>, vector<2x128xf32> -> vector<2x128xf32>
    %131 = vector.broadcast %121 : vector<1x128xf32> to vector<2x128xf32>
    %132 = arith.addf %131, %130 : vector<2x128xf32>
    %133 = vector.extract_strided_slice %120 {offsets = [0, 2, 0], sizes = [2, 1, 64], strides = [1, 1, 1]} : vector<2x8x64xf32> to vector<2x1x64xf32>
    %134 = vector.shape_cast %133 : vector<2x1x64xf32> to vector<2x64xf32>
    %135 = vector.extract_strided_slice %120 {offsets = [0, 3, 0], sizes = [2, 1, 64], strides = [1, 1, 1]} : vector<2x8x64xf32> to vector<2x1x64xf32>
    %136 = vector.shape_cast %135 : vector<2x1x64xf32> to vector<2x64xf32>
    %137 = arith.maximumf %134, %136 : vector<2x64xf32>
    %138 = arith.truncf %137 : vector<2x64xf32> to vector<2x64xbf16>
    %c1_111 = arith.constant 1 : index
    %c0_112 = arith.constant 0 : index
    %c0_113 = arith.constant 0 : index
    %139 = vector.load %arg6[%c1_111, %c0_112, %c0_113] : memref<4x64x128xbf16, #tpu.memory_space<vmem>>, vector<1x64x128xbf16>
    %140 = vector.shape_cast %139 : vector<1x64x128xbf16> to vector<64x128xbf16>
    %cst_114 = arith.constant dense<0.000000e+00> : vector<2x128xf32>
    %141 = tpu.matmul %138, %140, %cst_114 {dimension_numbers = #tpu.dot_dimension_numbers<[1], [0], [0], [1], [0, 0, 1, 1], [], []>} : vector<2x64xbf16>, vector<64x128xbf16>, vector<2x128xf32> -> vector<2x128xf32>
    %142 = arith.addf %132, %141 : vector<2x128xf32>
    %143 = vector.extract_strided_slice %120 {offsets = [0, 4, 0], sizes = [2, 1, 64], strides = [1, 1, 1]} : vector<2x8x64xf32> to vector<2x1x64xf32>
    %144 = vector.shape_cast %143 : vector<2x1x64xf32> to vector<2x64xf32>
    %145 = vector.extract_strided_slice %120 {offsets = [0, 5, 0], sizes = [2, 1, 64], strides = [1, 1, 1]} : vector<2x8x64xf32> to vector<2x1x64xf32>
    %146 = vector.shape_cast %145 : vector<2x1x64xf32> to vector<2x64xf32>
    %147 = arith.maximumf %144, %146 : vector<2x64xf32>
    %148 = arith.truncf %147 : vector<2x64xf32> to vector<2x64xbf16>
    %c2_115 = arith.constant 2 : index
    %c0_116 = arith.constant 0 : index
    %c0_117 = arith.constant 0 : index
    %149 = vector.load %arg6[%c2_115, %c0_116, %c0_117] : memref<4x64x128xbf16, #tpu.memory_space<vmem>>, vector<1x64x128xbf16>
    %150 = vector.shape_cast %149 : vector<1x64x128xbf16> to vector<64x128xbf16>
    %cst_118 = arith.constant dense<0.000000e+00> : vector<2x128xf32>
    %151 = tpu.matmul %148, %150, %cst_118 {dimension_numbers = #tpu.dot_dimension_numbers<[1], [0], [0], [1], [0, 0, 1, 1], [], []>} : vector<2x64xbf16>, vector<64x128xbf16>, vector<2x128xf32> -> vector<2x128xf32>
    %152 = arith.addf %142, %151 : vector<2x128xf32>
    %153 = vector.extract_strided_slice %120 {offsets = [0, 6, 0], sizes = [2, 1, 64], strides = [1, 1, 1]} : vector<2x8x64xf32> to vector<2x1x64xf32>
    %154 = vector.shape_cast %153 : vector<2x1x64xf32> to vector<2x64xf32>
    %155 = vector.extract_strided_slice %120 {offsets = [0, 7, 0], sizes = [2, 1, 64], strides = [1, 1, 1]} : vector<2x8x64xf32> to vector<2x1x64xf32>
    %156 = vector.shape_cast %155 : vector<2x1x64xf32> to vector<2x64xf32>
    %157 = arith.maximumf %154, %156 : vector<2x64xf32>
    %158 = arith.truncf %157 : vector<2x64xf32> to vector<2x64xbf16>
    %c3_119 = arith.constant 3 : index
    %c0_120 = arith.constant 0 : index
    %c0_121 = arith.constant 0 : index
    %159 = vector.load %arg6[%c3_119, %c0_120, %c0_121] : memref<4x64x128xbf16, #tpu.memory_space<vmem>>, vector<1x64x128xbf16>
    %160 = vector.shape_cast %159 : vector<1x64x128xbf16> to vector<64x128xbf16>
    %cst_122 = arith.constant dense<0.000000e+00> : vector<2x128xf32>
    %161 = tpu.matmul %158, %160, %cst_122 {dimension_numbers = #tpu.dot_dimension_numbers<[1], [0], [0], [1], [0, 0, 1, 1], [], []>} : vector<2x64xbf16>, vector<64x128xbf16>, vector<2x128xf32> -> vector<2x128xf32>
    %162 = arith.addf %152, %161 : vector<2x128xf32>
    %cst_123 = arith.constant 0.000000e+00 : f32
    %163 = vector.broadcast %cst_123 : f32 to vector<2x128xf32>
    %164 = arith.maximumf %162, %163 : vector<2x128xf32>
    %165 = arith.truncf %164 : vector<2x128xf32> to vector<2x128xbf16>
    %c0_124 = arith.constant 0 : index
    %c0_125 = arith.constant 0 : index
    %166 = vector.load %arg8[%c0_124, %c0_125] : memref<128x128xbf16, #tpu.memory_space<vmem>>, vector<128x128xbf16>
    %cst_126 = arith.constant dense<0.000000e+00> : vector<2x128xf32>
    %167 = tpu.matmul %165, %166, %cst_126 {dimension_numbers = #tpu.dot_dimension_numbers<[1], [0], [0], [1], [0, 0, 1, 1], [], []>} : vector<2x128xbf16>, vector<128x128xbf16>, vector<2x128xf32> -> vector<2x128xf32>
    %c0_127 = arith.constant 0 : index
    %c0_128 = arith.constant 0 : index
    %168 = vector.load %arg9[%c0_127, %c0_128] : memref<1x128xf32, #tpu.memory_space<vmem>>, vector<1x128xf32>
    %169 = vector.broadcast %168 : vector<1x128xf32> to vector<2x128xf32>
    %170 = arith.addf %167, %169 : vector<2x128xf32>
    %cst_129 = arith.constant 0.000000e+00 : f32
    %171 = vector.broadcast %cst_129 : f32 to vector<2x128xf32>
    %172 = arith.maximumf %170, %171 : vector<2x128xf32>
    %173 = arith.truncf %172 : vector<2x128xf32> to vector<2x128xbf16>
    %c0_130 = arith.constant 0 : index
    %c0_131 = arith.constant 0 : index
    %174 = vector.load %arg10[%c0_130, %c0_131] : memref<128x128xbf16, #tpu.memory_space<vmem>>, vector<128x128xbf16>
    %cst_132 = arith.constant dense<0.000000e+00> : vector<2x128xf32>
    %175 = tpu.matmul %173, %174, %cst_132 {dimension_numbers = #tpu.dot_dimension_numbers<[1], [0], [0], [1], [0, 0, 1, 1], [], []>} : vector<2x128xbf16>, vector<128x128xbf16>, vector<2x128xf32> -> vector<2x128xf32>
    %176 = arith.addf %172, %175 : vector<2x128xf32>
    %c0_133 = arith.constant 0 : index
    %c0_134 = arith.constant 0 : index
    %177 = vector.load %arg11[%c0_133, %c0_134] : memref<1x128xf32, #tpu.memory_space<vmem>>, vector<1x128xf32>
    %178 = vector.broadcast %177 : vector<1x128xf32> to vector<2x128xf32>
    %179 = arith.addf %176, %178 : vector<2x128xf32>
    %c0_135 = arith.constant 0 : index
    %c0_136 = arith.constant 0 : index
    %180 = vector.load %arg12[%c0_135, %c0_136] : memref<2x128xf32, #tpu.memory_space<vmem>>, vector<2x128xf32>
    tpu.vector_store %arg12[%c0_135, %c0_136], %179 {strides = array<i32>} : memref<2x128xf32, #tpu.memory_space<vmem>>, vector<2x128xf32>,
    return
  }
  func.func @transform_0(%arg0: i32) -> (i32, i32, i32, i32) {
    %c0_i32 = arith.constant 0 : i32
    %c0_i32_0 = arith.constant 0 : i32
    %c0_i32_1 = arith.constant 0 : i32
    %c0_i32_2 = arith.constant 0 : i32
    return %arg0, %c0_i32, %c0_i32_0, %c0_i32_1 : i32, i32, i32, i32
  }
  func.func @transform_1(%arg0: i32) -> (i32, i32, i32) {
    %c0_i32 = arith.constant 0 : i32
    %c0_i32_0 = arith.constant 0 : i32
    %c0_i32_1 = arith.constant 0 : i32
    %c0_i32_2 = arith.constant 0 : i32
    return %c0_i32, %c0_i32_0, %c0_i32_1 : i32, i32, i32
  }
  func.func @transform_2(%arg0: i32) -> (i32, i32) {
    %c0_i32 = arith.constant 0 : i32
    %c0_i32_0 = arith.constant 0 : i32
    %c0_i32_1 = arith.constant 0 : i32
    return %c0_i32, %c0_i32_0 : i32, i32
  }
  func.func @transform_3(%arg0: i32) -> (i32, i32, i32) {
    %c0_i32 = arith.constant 0 : i32
    %c0_i32_0 = arith.constant 0 : i32
    %c0_i32_1 = arith.constant 0 : i32
    %c0_i32_2 = arith.constant 0 : i32
    return %c0_i32, %c0_i32_0, %c0_i32_1 : i32, i32, i32
  }
  func.func @transform_4(%arg0: i32) -> (i32, i32) {
    %c0_i32 = arith.constant 0 : i32
    %c0_i32_0 = arith.constant 0 : i32
    %c0_i32_1 = arith.constant 0 : i32
    return %c0_i32, %c0_i32_0 : i32, i32
  }
  func.func @transform_5(%arg0: i32) -> (i32, i32, i32) {
    %c0_i32 = arith.constant 0 : i32
    %c0_i32_0 = arith.constant 0 : i32
    %c0_i32_1 = arith.constant 0 : i32
    %c0_i32_2 = arith.constant 0 : i32
    return %c0_i32, %c0_i32_0, %c0_i32_1 : i32, i32, i32
  }
  func.func @transform_6(%arg0: i32) -> (i32, i32) {
    %c0_i32 = arith.constant 0 : i32
    %c0_i32_0 = arith.constant 0 : i32
    %c0_i32_1 = arith.constant 0 : i32
    return %c0_i32, %c0_i32_0 : i32, i32
  }
  func.func @transform_7(%arg0: i32) -> (i32, i32) {
    %c0_i32 = arith.constant 0 : i32
    %c0_i32_0 = arith.constant 0 : i32
    %c0_i32_1 = arith.constant 0 : i32
    return %c0_i32, %c0_i32_0 : i32, i32
  }
  func.func @transform_8(%arg0: i32) -> (i32, i32) {
    %c0_i32 = arith.constant 0 : i32
    %c0_i32_0 = arith.constant 0 : i32
    %c0_i32_1 = arith.constant 0 : i32
    return %c0_i32, %c0_i32_0 : i32, i32
  }
  func.func @transform_9(%arg0: i32) -> (i32, i32) {
    %c0_i32 = arith.constant 0 : i32
    %c0_i32_0 = arith.constant 0 : i32
    %c0_i32_1 = arith.constant 0 : i32
    return %c0_i32, %c0_i32_0 : i32, i32
  }
  func.func @transform_10(%arg0: i32) -> (i32, i32) {
    %c0_i32 = arith.constant 0 : i32
    %c0_i32_0 = arith.constant 0 : i32
    %c0_i32_1 = arith.constant 0 : i32
    return %c0_i32, %c0_i32_0 : i32, i32
  }
  func.func @transform_11(%arg0: i32) -> (i32, i32) {
    %c0_i32 = arith.constant 0 : i32
    %c0_i32_0 = arith.constant 0 : i32
    return %arg0, %c0_i32 : i32, i32
  }
}

</mosaic_0001>

<llo_original>
// kernel: _fused_forward.1
$region0: #{_fused_forward.1}
  #allocation0 [shape = 'u32[]', space=smem, size = 0x4, offset = 0x4, fixed_abs, tag = 'smem constant byte address 0x4 - core index']
  #allocation1 [shape = 'u32[144,128]{1,0:T(1,128)}', space=vmem, size = 0x12000, scoped, tag = 'internal scratch']
  #allocation2 [shape = 'f32[2,12,72]{2,1,0:T(8,128)}', space=vmem, size = 0x4000, scoped, tag = 'scratch operand']
  %s0 = inlined_call_operand.hbm [shape: f32[2,2,14,28], index: 0, kind: input, shape index: {}]
  %s1 = inlined_call_operand.hbm [shape: bf16[5,28,144], index: 1, kind: input, shape index: {}]
  %s2 = inlined_call_operand.hbm [shape: f32[1,144], index: 2, kind: input, shape index: {}]
  %s3 = inlined_call_operand.hbm [shape: bf16[5,72,128], index: 3, kind: input, shape index: {}]
  %s4 = inlined_call_operand.hbm [shape: f32[1,128], index: 4, kind: input, shape index: {}]
  %s5 = inlined_call_operand.hbm [shape: bf16[4,64,128], index: 5, kind: input, shape index: {}]
  %s6 = inlined_call_operand.hbm [shape: f32[1,128], index: 6, kind: input, shape index: {}]
  %s7 = inlined_call_operand.hbm [shape: bf16[128,128], index: 7, kind: input, shape index: {}]
  %s8 = inlined_call_operand.hbm [shape: f32[1,128], index: 8, kind: input, shape index: {}]
  %s9 = inlined_call_operand.hbm [shape: bf16[128,128], index: 9, kind: input, shape index: {}]
  %s10 = inlined_call_operand.hbm [shape: f32[1,128], index: 10, kind: input, shape index: {}]
  %s11 = inlined_call_operand.hbm [shape: f32[2,128], index: 11, kind: output, shape index: {}]
  %s12 = sld [smem:[#allocation0]]
  $region98: #{_fused_forward.1} parent=0
    _
  %s14 = ssub.s32 1, %s12
  %s15 = scalar_select 0, %s14, %s12
  $region1: #{_fused_forward.1} parent=0
    #allocation3 [shape = 'u8[32768]{0}', space=vmem, size = 0x8000, scoped, tag = 'input window, operand 0, single buffered']
    #allocation4 [shape = 's32[1]{0}', space=sflag, size = 0x4, scoped, tag = 'scoped memory for _fused_forward.1']
    #allocation5 [shape = 's32[1]{0}', space=sflag, size = 0x4, scoped, tag = 'scoped memory for _fused_forward.1']
    #allocation6 [shape = 'u8[81920]{0}', space=vmem, size = 0x14000, scoped, tag = 'input window, operand 1, single buffered']
    #allocation7 [shape = 's32[1]{0}', space=sflag, size = 0x4, scoped, tag = 'scoped memory for _fused_forward.1']
    #allocation8 [shape = 'u8[1024]{0}', space=vmem, size = 0x400, scoped, tag = 'input window, operand 2, single buffered']
    #allocation9 [shape = 'u8[92160]{0}', space=vmem, size = 0x16800, scoped, tag = 'input window, operand 3, single buffered']
    #allocation10 [shape = 's32[1]{0}', space=sflag, size = 0x4, scoped, tag = 'scoped memory for _fused_forward.1']
    #allocation11 [shape = 'u8[512]{0}', space=vmem, size = 0x400, scoped, tag = 'input window, operand 4, single buffered']
    #allocation12 [shape = 'u8[65536]{0}', space=vmem, size = 0x10000, scoped, tag = 'input window, operand 5, single buffered']
    #allocation13 [shape = 's32[1]{0}', space=sflag, size = 0x4, scoped, tag = 'scoped memory for _fused_forward.1']
    #allocation14 [shape = 'u8[512]{0}', space=vmem, size = 0x400, scoped, tag = 'input window, operand 6, single buffered']
    #allocation15 [shape = 'u8[32768]{0}', space=vmem, size = 0x8000, scoped, tag = 'input window, operand 7, single buffered']
    #allocation16 [shape = 's32[1]{0}', space=sflag, size = 0x4, scoped, tag = 'scoped memory for _fused_forward.1']
    #allocation17 [shape = 'u8[512]{0}', space=vmem, size = 0x400, scoped, tag = 'input window, operand 8, single buffered']
    #allocation18 [shape = 'u8[32768]{0}', space=vmem, size = 0x8000, scoped, tag = 'input window, operand 9, single buffered']
    #allocation19 [shape = 's32[1]{0}', space=sflag, size = 0x4, scoped, tag = 'scoped memory for _fused_forward.1']
    #allocation20 [shape = 'u8[512]{0}', space=vmem, size = 0x400, scoped, tag = 'input window, operand 10, single buffered']
    #allocation21 [shape = 'u8[1024]{0}', space=vmem, size = 0x400, scoped, tag = 'output window, operand 0, single buffered']
    %16 = vsyncpa [#allocation4], 0
    %17 = vsyncpa [#allocation7], 0
    %18 = vsyncpa [#allocation10], 0
    %19 = vsyncpa [#allocation13], 0
    %20 = vsyncpa [#allocation16], 0
    %21 = vsyncpa [#allocation19], 0
    %22 = vsyncpa [#allocation5], 0
    // Predicated region
    $region2: #{_fused_forward.1} parent=1 // pred_check
      _
    $region3: #{_fused_forward.1} parent=1 // pred_check_branch
      %24 = sbr.rel (0) target = $region5
    $region4: #{_fused_forward.1} parent=1 // pred_region
      %s26 = ssub.s32 1024, 1024
      %27 = vsyncadd [#allocation4], %s26
      %s28 = sshll.u32 [#allocation3], 4
      %s29 = int_to_ptr.vmem [resolvable:$true] %s28
      %34 = dma.hbm_to_vmem [thread:$0]  %s0, 1024, %s29, [#allocation4], 128, 128, 8
    $region5: #{_fused_forward.1} parent=1 // pred_fallthru
      _
    // Predicated region
    $region6: #{_fused_forward.1} parent=1 // pred_check
      _
    $region7: #{_fused_forward.1} parent=1 // pred_check_branch
      %36 = sbr.rel (0) target = $region9
    $region8: #{_fused_forward.1} parent=1 // pred_region
      %s38 = ssub.s32 2560, 2560
      %39 = vsyncadd [#allocation7], %s38
      %s40 = sshll.u32 [#allocation6], 4
      %s41 = int_to_ptr.vmem [resolvable:$true] %s40
      %46 = dma.hbm_to_vmem [thread:$0]  %s1, 2560, %s41, [#allocation7], 128, 128, 8
    $region9: #{_fused_forward.1} parent=1 // pred_fallthru
      _
    // Predicated region
    $region10: #{_fused_forward.1} parent=1 // pred_check
      _
    $region11: #{_fused_forward.1} parent=1 // pred_check_branch
      %48 = sbr.rel (0) target = $region13
    $region12: #{_fused_forward.1} parent=1 // pred_region
      %s50 = ssub.s32 32, 32
      %51 = vsyncadd [#allocation7], %s50
      %s53 = sshll.u32 [#allocation8], 4
      %s54 = int_to_ptr.vmem [resolvable:$true] %s53
      %56 = dma.hbm_to_vmem [thread:$0]  %s2, 32, %s54, [#allocation7]
    $region13: #{_fused_forward.1} parent=1 // pred_fallthru
      _
    // Predicated region
    $region14: #{_fused_forward.1} parent=1 // pred_check
      _
    $region15: #{_fused_forward.1} parent=1 // pred_check_branch
      %58 = sbr.rel (0) target = $region17
    $region16: #{_fused_forward.1} parent=1 // pred_region
      %s60 = ssub.s32 2880, 2880
      %61 = vsyncadd [#allocation10], %s60
      %s62 = sshll.u32 [#allocation9], 4
      %s63 = int_to_ptr.vmem [resolvable:$true] %s62
      %68 = dma.hbm_to_vmem [thread:$0]  %s3, 2880, %s63, [#allocation10], 64, 64, 4
    $region17: #{_fused_forward.1} parent=1 // pred_fallthru
      _
    // Predicated region
    $region18: #{_fused_forward.1} parent=1 // pred_check
      _
    $region19: #{_fused_forward.1} parent=1 // pred_check_branch
      %70 = sbr.rel (0) target = $region21
    $region20: #{_fused_forward.1} parent=1 // pred_region
      %s72 = ssub.s32 16, 16
      %73 = vsyncadd [#allocation10], %s72
      %s75 = sshll.u32 [#allocation11], 4
      %s76 = int_to_ptr.vmem [resolvable:$true] %s75
      %78 = dma.hbm_to_vmem [thread:$0]  %s4, 16, %s76, [#allocation10]
    $region21: #{_fused_forward.1} parent=1 // pred_fallthru
      _
    // Predicated region
    $region22: #{_fused_forward.1} parent=1 // pred_check
      _
    $region23: #{_fused_forward.1} parent=1 // pred_check_branch
      %80 = sbr.rel (0) target = $region25
    $region24: #{_fused_forward.1} parent=1 // pred_region
      %s82 = ssub.s32 2048, 2048
      %83 = vsyncadd [#allocation13], %s82
      %s84 = sshll.u32 [#allocation12], 4
      %s85 = int_to_ptr.vmem [resolvable:$true] %s84
      %90 = dma.hbm_to_vmem [thread:$0]  %s5, 2048, %s85, [#allocation13], 64, 64, 4
    $region25: #{_fused_forward.1} parent=1 // pred_fallthru
      _
    // Predicated region
    $region26: #{_fused_forward.1} parent=1 // pred_check
      _
    $region27: #{_fused_forward.1} parent=1 // pred_check_branch
      %92 = sbr.rel (0) target = $region29
    $region28: #{_fused_forward.1} parent=1 // pred_region
      %s94 = ssub.s32 16, 16
      %95 = vsyncadd [#allocation13], %s94
      %s97 = sshll.u32 [#allocation14], 4
      %s98 = int_to_ptr.vmem [resolvable:$true] %s97
      %100 = dma.hbm_to_vmem [thread:$0]  %s6, 16, %s98, [#allocation13]
    $region29: #{_fused_forward.1} parent=1 // pred_fallthru
      _
    // Predicated region
    $region30: #{_fused_forward.1} parent=1 // pred_check
      _
    $region31: #{_fused_forward.1} parent=1 // pred_check_branch
      %102 = sbr.rel (0) target = $region33
    $region32: #{_fused_forward.1} parent=1 // pred_region
      %s104 = ssub.s32 1024, 1024
      %105 = vsyncadd [#allocation16], %s104
      %s106 = sshll.u32 [#allocation15], 4
      %s107 = int_to_ptr.vmem [resolvable:$true] %s106
      %112 = dma.hbm_to_vmem [thread:$0]  %s7, 1024, %s107, [#allocation16], 64, 64, 4
    $region33: #{_fused_forward.1} parent=1 // pred_fallthru
      _
    // Predicated region
    $region34: #{_fused_forward.1} parent=1 // pred_check
      _
    $region35: #{_fused_forward.1} parent=1 // pred_check_branch
      %114 = sbr.rel (0) target = $region37
    $region36: #{_fused_forward.1} parent=1 // pred_region
      %s116 = ssub.s32 16, 16
      %117 = vsyncadd [#allocation16], %s116
      %s119 = sshll.u32 [#allocation17], 4
      %s120 = int_to_ptr.vmem [resolvable:$true] %s119
      %122 = dma.hbm_to_vmem [thread:$0]  %s8, 16, %s120, [#allocation16]
    $region37: #{_fused_forward.1} parent=1 // pred_fallthru
      _
    // Predicated region
    $region38: #{_fused_forward.1} parent=1 // pred_check
      _
    $region39: #{_fused_forward.1} parent=1 // pred_check_branch
      %124 = sbr.rel (0) target = $region41
    $region40: #{_fused_forward.1} parent=1 // pred_region
      %s126 = ssub.s32 1024, 1024
      %127 = vsyncadd [#allocation19], %s126
      %s128 = sshll.u32 [#allocation18], 4
      %s129 = int_to_ptr.vmem [resolvable:$true] %s128
      %134 = dma.hbm_to_vmem [thread:$0]  %s9, 1024, %s129, [#allocation19], 64, 64, 4
    $region41: #{_fused_forward.1} parent=1 // pred_fallthru
      _
    // Predicated region
    $region42: #{_fused_forward.1} parent=1 // pred_check
      _
    $region43: #{_fused_forward.1} parent=1 // pred_check_branch
      %136 = sbr.rel (0) target = $region45
    $region44: #{_fused_forward.1} parent=1 // pred_region
      %s138 = ssub.s32 16, 16
      %139 = vsyncadd [#allocation19], %s138
      %s141 = sshll.u32 [#allocation20], 4
      %s142 = int_to_ptr.vmem [resolvable:$true] %s141
      %144 = dma.hbm_to_vmem [thread:$0]  %s10, 16, %s142, [#allocation19]
    $region45: #{_fused_forward.1} parent=1 // pred_fallthru
      _
    // Predicated region
    $region46: #{_fused_forward.1} parent=1 // pred_check
      _
    $region47: #{_fused_forward.1} parent=1 // pred_check_branch
      %146 = sbr.rel (0) target = $region49
    $region48: #{_fused_forward.1} parent=1 // pred_region
      %147 = dma.done [#allocation4], 1024
    $region49: #{_fused_forward.1} parent=1 // pred_fallthru
      _
    // Predicated region
    $region50: #{_fused_forward.1} parent=1 // pred_check
      _
    $region51: #{_fused_forward.1} parent=1 // pred_check_branch
      %149 = sbr.rel (0) target = $region53
    $region52: #{_fused_forward.1} parent=1 // pred_region
      %150 = dma.done [#allocation7], 2560
    $region53: #{_fused_forward.1} parent=1 // pred_fallthru
      _
    // Predicated region
    $region54: #{_fused_forward.1} parent=1 // pred_check
      _
    $region55: #{_fused_forward.1} parent=1 // pred_check_branch
      %152 = sbr.rel (0) target = $region57
    $region56: #{_fused_forward.1} parent=1 // pred_region
      %153 = dma.done [#allocation7], 32
    $region57: #{_fused_forward.1} parent=1 // pred_fallthru
      _
    // Predicated region
    $region58: #{_fused_forward.1} parent=1 // pred_check
      _
    $region59: #{_fused_forward.1} parent=1 // pred_check_branch
      %155 = sbr.rel (0) target = $region61
    $region60: #{_fused_forward.1} parent=1 // pred_region
      %156 = dma.done [#allocation10], 2880
    $region61: #{_fused_forward.1} parent=1 // pred_fallthru
      _
    // Predicated region
    $region62: #{_fused_forward.1} parent=1 // pred_check
      _
    $region63: #{_fused_forward.1} parent=1 // pred_check_branch
      %158 = sbr.rel (0) target = $region65
    $region64: #{_fused_forward.1} parent=1 // pred_region
      %159 = dma.done [#allocation10], 16
    $region65: #{_fused_forward.1} parent=1 // pred_fallthru
      _
    // Predicated region
    $region66: #{_fused_forward.1} parent=1 // pred_check
      _
    $region67: #{_fused_forward.1} parent=1 // pred_check_branch
      %161 = sbr.rel (0) target = $region69
    $region68: #{_fused_forward.1} parent=1 // pred_region
      %162 = dma.done [#allocation13], 2048
    $region69: #{_fused_forward.1} parent=1 // pred_fallthru
      _
    // Predicated region
    $region70: #{_fused_forward.1} parent=1 // pred_check
      _
    $region71: #{_fused_forward.1} parent=1 // pred_check_branch
      %164 = sbr.rel (0) target = $region73
    $region72: #{_fused_forward.1} parent=1 // pred_region
      %165 = dma.done [#allocation13], 16
    $region73: #{_fused_forward.1} parent=1 // pred_fallthru
      _
    // Predicated region
    $region74: #{_fused_forward.1} parent=1 // pred_check
      _
    $region75: #{_fused_forward.1} parent=1 // pred_check_branch
      %167 = sbr.rel (0) target = $region77
    $region76: #{_fused_forward.1} parent=1 // pred_region
      %168 = dma.done [#allocation16], 1024
    $region77: #{_fused_forward.1} parent=1 // pred_fallthru
      _
    // Predicated region
    $region78: #{_fused_forward.1} parent=1 // pred_check
      _
    $region79: #{_fused_forward.1} parent=1 // pred_check_branch
      %170 = sbr.rel (0) target = $region81
    $region80: #{_fused_forward.1} parent=1 // pred_region
      %171 = dma.done [#allocation16], 16
    $region81: #{_fused_forward.1} parent=1 // pred_fallthru
      _
    // Predicated region
    $region82: #{_fused_forward.1} parent=1 // pred_check
      _
    $region83: #{_fused_forward.1} parent=1 // pred_check_branch
      %173 = sbr.rel (0) target = $region85
    $region84: #{_fused_forward.1} parent=1 // pred_region
      %174 = dma.done [#allocation19], 1024
    $region85: #{_fused_forward.1} parent=1 // pred_fallthru
      _
    // Predicated region
    $region86: #{_fused_forward.1} parent=1 // pred_check
      _
    $region87: #{_fused_forward.1} parent=1 // pred_check_branch
      %176 = sbr.rel (0) target = $region89
    $region88: #{_fused_forward.1} parent=1 // pred_region
      %177 = dma.done [#allocation19], 16
    $region89: #{_fused_forward.1} parent=1 // pred_fallthru
      _
    %v179 = vld [vmem:[#allocation3] sm:$0xff]
    %v180 = vld [vmem:[#allocation3 + $0x8] sm:$0xf]
    %v181 = vld [vmem:[#allocation3 + $0x20] sm:$0xff]
    %v182 = vld [vmem:[#allocation3 + $0x28] sm:$0xf]
    %v187 = vcombine.high %v179, %v179
    %v188 = vcombine.high %v181, %v181
    %v189 = vcombine.low %v179, %v187
    %v190 = vcombine.low %v180, %v181
    %v191 = vcombine.low %v188, %v182
    %v195 = vpack.c.bf16 %v190, %v189
    %v196 = vpack.c.bf16 %v191, %v191
    %v197 = vld [vmem:[#allocation3 + $0x1] sm:$0xff]
    %v198 = vld [vmem:[#allocation3 + $0x9] sm:$0xf]
    %v199 = vld [vmem:[#allocation3 + $0x21] sm:$0xff]
    %v200 = vld [vmem:[#allocation3 + $0x29] sm:$0xf]
    %v205 = vcombine.high %v197, %v197
    %v206 = vcombine.high %v199, %v199
    %v207 = vcombine.low %v197, %v205
    %v208 = vcombine.low %v198, %v199
    %v209 = vcombine.low %v206, %v200
    %v213 = vpack.c.bf16 %v208, %v207
    %v214 = vpack.c.bf16 %v209, %v209
    %v215 = vld [vmem:[#allocation3 + $0x2] sm:$0xff]
    %v216 = vld [vmem:[#allocation3 + $0xa] sm:$0xf]
    %v217 = vld [vmem:[#allocation3 + $0x22] sm:$0xff]
    %v218 = vld [vmem:[#allocation3 + $0x2a] sm:$0xf]
    %v223 = vcombine.high %v215, %v215
    %v224 = vcombine.high %v217, %v217
    %v225 = vcombine.low %v215, %v223
    %v226 = vcombine.low %v216, %v217
    %v227 = vcombine.low %v224, %v218
    %v231 = vpack.c.bf16 %v226, %v225
    %v232 = vpack.c.bf16 %v227, %v227
    %s233 = scalar_lea.vmem [#allocation3], 16
    %v234 = vld [vmem:[%s233] sm:$0xff]
    %v235 = vld [vmem:[%s233 + $0x8] sm:$0xf]
    %v236 = vld [vmem:[%s233 + $0x20] sm:$0xff]
    %v237 = vld [vmem:[%s233 + $0x28] sm:$0xf]
    %v242 = vcombine.high %v234, %v234
    %v243 = vcombine.high %v236, %v236
    %v244 = vcombine.low %v234, %v242
    %v245 = vcombine.low %v235, %v236
    %v246 = vcombine.low %v243, %v237
    %v250 = vpack.c.bf16 %v245, %v244
    %v251 = vpack.c.bf16 %v246, %v246
    %v252 = vld [vmem:[%s233 + $0x1] sm:$0xff]
    %v253 = vld [vmem:[%s233 + $0x9] sm:$0xf]
    %v254 = vld [vmem:[%s233 + $0x21] sm:$0xff]
    %v255 = vld [vmem:[%s233 + $0x29] sm:$0xf]
    %v260 = vcombine.high %v252, %v252
    %v261 = vcombine.high %v254, %v254
    %v262 = vcombine.low %v252, %v260
    %v263 = vcombine.low %v253, %v254
    %v264 = vcombine.low %v261, %v255
    %v268 = vpack.c.bf16 %v263, %v262
    %v269 = vpack.c.bf16 %v264, %v264
    %v270 = vld [vmem:[%s233 + $0x2] sm:$0xff]
    %v271 = vld [vmem:[%s233 + $0xa] sm:$0xf]
    %v272 = vld [vmem:[%s233 + $0x22] sm:$0xff]
    %v273 = vld [vmem:[%s233 + $0x2a] sm:$0xf]
    %v278 = vcombine.high %v270, %v270
    %v279 = vcombine.high %v272, %v272
    %v280 = vcombine.low %v270, %v278
    %v281 = vcombine.low %v271, %v272
    %v282 = vcombine.low %v279, %v273
    %v286 = vpack.c.bf16 %v281, %v280
    %v287 = vpack.c.bf16 %v282, %v282
    %v288 = vld [vmem:[#allocation6] sm:$0xff]
    %v289 = vld [vmem:[#allocation6 + $0x8] sm:$0xff]
    %v290 = vld [vmem:[#allocation6 + $0x10] sm:$0xff]
    %v291 = vld [vmem:[#allocation6 + $0x18] sm:$0x33]
    %s292 = scalar_lea.vmem [#allocation6], 32
    %v293 = vld [vmem:[%s292] sm:$0xff]
    %v294 = vld [vmem:[%s292 + $0x8] sm:$0xff]
    %v295 = vld [vmem:[%s292 + $0x10] sm:$0xff]
    %v296 = vld [vmem:[%s292 + $0x18] sm:$0x33]
    %v301 = vunpack.c.l.b16 %v293
    %v302 = vunpack.c.h.b16 %v293
    %v303 = vunpack.c.l.b16 %v294
    %v304 = vunpack.c.h.b16 %v294
    %v305 = vunpack.c.l.b16 %v295
    %v306 = vunpack.c.h.b16 %v295
    %v307 = vunpack.c.l.b16 %v296
    %v308 = vunpack.c.h.b16 %v296
    %v309 = vpack.c.b16 %v303, %v301
    %v310 = vpack.c.b16 %v304, %v302
    %v311 = vpack.c.b16 %v307, %v305
    %v312 = vpack.c.b16 %v308, %v306
    %vm315 = vcmask 228352
    %v317 = vsel %vm315, %v250, 0
    %v320 = vsel %vm315, %v251, 0
    %vm322 = vcmask 1045504
    %v324 = vsel %vm322, %v311, 0
    %v327 = vsel %vm322, %v312, 0
    %329 = vmatprep.subr.bf16.mxu0 %v310
    %330 = vmatpush1.bf16.msra.mxu0 %v309
    %331 = vmatprep.subr.bf16.mxu0 %v327
    %332 = vmatpush1.bf16.msra.mxu0 %v324
    %333 = vmatprep.subr.bf16.mxu0 0
    %334 = vmatpush1.bf16.msra.mxu0 0
    %335 = vmatprep.subr.bf16.mxu0 0
    %336 = vmatpush1.bf16.msra.mxu0 0
    %337 = vmatprep.subr.bf16.mxu0 0
    %338 = vmatpush1.bf16.msra.mxu0 0
    %339 = vmatprep.subr.bf16.mxu0 0
    %340 = vmatpush1.bf16.msra.mxu0 0
    %341 = vmatprep.subr.bf16.mxu0 0
    %342 = vmatpush1.bf16.msra.mxu0 0
    %343 = vmatprep.subr.bf16.mxu0 0
    %344 = vmatpush1.bf16.msra.mxu0 0
    %345 = vmatprep.subr.bf16.mxu0 0
    %346 = vmatpush1.bf16.msra.mxu0 0
    %347 = vmatprep.subr.bf16.mxu0 0
    %348 = vmatpush1.bf16.msra.mxu0 0
    %349 = vmatprep.subr.bf16.mxu0 0
    %350 = vmatpush1.bf16.msra.mxu0 0
    %351 = vmatprep.subr.bf16.mxu0 0
    %352 = vmatpush1.bf16.msra.mxu0 0
    %353 = vmatprep.subr.bf16.mxu0 0
    %354 = vmatpush1.bf16.msra.mxu0 0
    %355 = vmatprep.subr.bf16.mxu0 0
    %356 = vmatpush1.bf16.msra.mxu0 0
    %357 = vmatprep.subr.bf16.mxu0 0
    %358 = vmatpush1.bf16.msra.mxu0 0
    %359 = vmatprep.subr.bf16.mxu0 0
    %360 = vmatpush1.bf16.msra.mxu0 0
    %361 = vmatprep.mubr.bf16.mxu0 0
    %362 = vmatmul.mubr.bf16.gmra.mrb[0].mxu0 %v317
    %v363 = vpop.f32.mrb[0].mxu0
    %v364 = vadd.f32 0.0, %v363
    %v365 = vpop.f32.mrb[0].mxu0
    %v366 = vadd.f32 0.0, %v365
    %v367 = vpop.f32.mrb[0].mxu0
    %v368 = vadd.f32 0.0, %v367
    %v369 = vpop.f32.mrb[0].mxu0
    %v370 = vadd.f32 0.0, %v369
    %371 = vmatprep.mubr.bf16.mxu0 0
    %372 = vmatmul.mubr.bf16.gmra.mrb[0].mxu0 %v320
    %v373 = vpop.f32.mrb[0].mxu0
    %v374 = vadd.f32 0.0, %v373
    %v375 = vpop.f32.mrb[0].mxu0
    %v376 = vadd.f32 0.0, %v375
    %v377 = vpop.f32.mrb[0].mxu0
    %v378 = vpop.f32.mrb[0].mxu0
    %379 = vdwg.mxu0
    %v384 = vunpack.c.l.b16 %v288
    %v385 = vunpack.c.h.b16 %v288
    %v386 = vunpack.c.l.b16 %v289
    %v387 = vunpack.c.h.b16 %v289
    %v388 = vunpack.c.l.b16 %v290
    %v389 = vunpack.c.h.b16 %v290
    %v390 = vunpack.c.l.b16 %v291
    %v391 = vunpack.c.h.b16 %v291
    %v392 = vpack.c.b16 %v386, %v384
    %v393 = vpack.c.b16 %v387, %v385
    %v394 = vpack.c.b16 %v390, %v388
    %v395 = vpack.c.b16 %v391, %v389
    %v399 = vsel %vm315, %v195, 0
    %v402 = vsel %vm315, %v196, 0
    %v405 = vsel %vm322, %v394, 0
    %v408 = vsel %vm322, %v395, 0
    %410 = vmatprep.subr.bf16.mxu0 %v393
    %411 = vmatpush1.bf16.msra.mxu0 %v392
    %412 = vmatprep.subr.bf16.mxu0 %v408
    %413 = vmatpush1.bf16.msra.mxu0 %v405
    %414 = vmatprep.subr.bf16.mxu0 0
    %415 = vmatpush1.bf16.msra.mxu0 0
    %416 = vmatprep.subr.bf16.mxu0 0
    %417 = vmatpush1.bf16.msra.mxu0 0
    %418 = vmatprep.subr.bf16.mxu0 0
    %419 = vmatpush1.bf16.msra.mxu0 0
    %420 = vmatprep.subr.bf16.mxu0 0
    %421 = vmatpush1.bf16.msra.mxu0 0
    %422 = vmatprep.subr.bf16.mxu0 0
    %423 = vmatpush1.bf16.msra.mxu0 0
    %424 = vmatprep.subr.bf16.mxu0 0
    %425 = vmatpush1.bf16.msra.mxu0 0
    %426 = vmatprep.subr.bf16.mxu0 0
    %427 = vmatpush1.bf16.msra.mxu0 0
    %428 = vmatprep.subr.bf16.mxu0 0
    %429 = vmatpush1.bf16.msra.mxu0 0
    %430 = vmatprep.subr.bf16.mxu0 0
    %431 = vmatpush1.bf16.msra.mxu0 0
    %432 = vmatprep.subr.bf16.mxu0 0
    %433 = vmatpush1.bf16.msra.mxu0 0
    %434 = vmatprep.subr.bf16.mxu0 0
    %435 = vmatpush1.bf16.msra.mxu0 0
    %436 = vmatprep.subr.bf16.mxu0 0
    %437 = vmatpush1.bf16.msra.mxu0 0
    %438 = vmatprep.subr.bf16.mxu0 0
    %439 = vmatpush1.bf16.msra.mxu0 0
    %440 = vmatprep.subr.bf16.mxu0 0
    %441 = vmatpush1.bf16.msra.mxu0 0
    %442 = vmatprep.mubr.bf16.mxu0 0
    %443 = vmatmul.mubr.bf16.gmra.mrb[0].mxu0 %v399
    %v444 = vpop.f32.mrb[0].mxu0
    %v445 = vadd.f32 %v364, %v444
    %v446 = vpop.f32.mrb[0].mxu0
    %v447 = vadd.f32 %v366, %v446
    %v448 = vpop.f32.mrb[0].mxu0
    %v449 = vadd.f32 %v368, %v448
    %v450 = vpop.f32.mrb[0].mxu0
    %v451 = vadd.f32 %v370, %v450
    %452 = vmatprep.mubr.bf16.mxu0 0
    %453 = vmatmul.mubr.bf16.gmra.mrb[0].mxu0 %v402
    %v454 = vpop.f32.mrb[0].mxu0
    %v455 = vadd.f32 %v374, %v454
    %v456 = vpop.f32.mrb[0].mxu0
    %v457 = vadd.f32 %v376, %v456
    %v458 = vpop.f32.mrb[0].mxu0
    %v459 = vpop.f32.mrb[0].mxu0
    %460 = vdwg.mxu0
    %s461 = scalar_lea.vmem [#allocation6], 64
    %v462 = vld [vmem:[%s461] sm:$0xff]
    %v463 = vld [vmem:[%s461 + $0x8] sm:$0xff]
    %v464 = vld [vmem:[%s461 + $0x10] sm:$0xff]
    %v465 = vld [vmem:[%s461 + $0x18] sm:$0x33]
    %v470 = vunpack.c.l.b16 %v462
    %v471 = vunpack.c.h.b16 %v462
    %v472 = vunpack.c.l.b16 %v463
    %v473 = vunpack.c.h.b16 %v463
    %v474 = vunpack.c.l.b16 %v464
    %v475 = vunpack.c.h.b16 %v464
    %v476 = vunpack.c.l.b16 %v465
    %v477 = vunpack.c.h.b16 %v465
    %v478 = vpack.c.b16 %v472, %v470
    %v479 = vpack.c.b16 %v473, %v471
    %v480 = vpack.c.b16 %v476, %v474
    %v481 = vpack.c.b16 %v477, %v475
    %v485 = vsel %vm315, %v213, 0
    %v488 = vsel %vm315, %v214, 0
    %v491 = vsel %vm322, %v480, 0
    %v494 = vsel %vm322, %v481, 0
    %496 = vmatprep.subr.bf16.mxu0 %v479
    %497 = vmatpush1.bf16.msra.mxu0 %v478
    %498 = vmatprep.subr.bf16.mxu0 %v494
    %499 = vmatpush1.bf16.msra.mxu0 %v491
    %500 = vmatprep.subr.bf16.mxu0 0
    %501 = vmatpush1.bf16.msra.mxu0 0
    %502 = vmatprep.subr.bf16.mxu0 0
    %503 = vmatpush1.bf16.msra.mxu0 0
    %504 = vmatprep.subr.bf16.mxu0 0
    %505 = vmatpush1.bf16.msra.mxu0 0
    %506 = vmatprep.subr.bf16.mxu0 0
    %507 = vmatpush1.bf16.msra.mxu0 0
    %508 = vmatprep.subr.bf16.mxu0 0
    %509 = vmatpush1.bf16.msra.mxu0 0
    %510 = vmatprep.subr.bf16.mxu0 0
    %511 = vmatpush1.bf16.msra.mxu0 0
    %512 = vmatprep.subr.bf16.mxu0 0
    %513 = vmatpush1.bf16.msra.mxu0 0
    %514 = vmatprep.subr.bf16.mxu0 0
    %515 = vmatpush1.bf16.msra.mxu0 0
    %516 = vmatprep.subr.bf16.mxu0 0
    %517 = vmatpush1.bf16.msra.mxu0 0
    %518 = vmatprep.subr.bf16.mxu0 0
    %519 = vmatpush1.bf16.msra.mxu0 0
    %520 = vmatprep.subr.bf16.mxu0 0
    %521 = vmatpush1.bf16.msra.mxu0 0
    %522 = vmatprep.subr.bf16.mxu0 0
    %523 = vmatpush1.bf16.msra.mxu0 0
    %524 = vmatprep.subr.bf16.mxu0 0
    %525 = vmatpush1.bf16.msra.mxu0 0
    %526 = vmatprep.subr.bf16.mxu0 0
    %527 = vmatpush1.bf16.msra.mxu0 0
    %528 = vmatprep.mubr.bf16.mxu0 0
    %529 = vmatmul.mubr.bf16.gmra.mrb[0].mxu0 %v485
    %v530 = vpop.f32.mrb[0].mxu0
    %v531 = vadd.f32 0.0, %v530
    %v532 = vpop.f32.mrb[0].mxu0
    %v533 = vadd.f32 0.0, %v532
    %v534 = vpop.f32.mrb[0].mxu0
    %v535 = vadd.f32 0.0, %v534
    %v536 = vpop.f32.mrb[0].mxu0
    %v537 = vadd.f32 0.0, %v536
    %538 = vmatprep.mubr.bf16.mxu0 0
    %539 = vmatmul.mubr.bf16.gmra.mrb[0].mxu0 %v488
    %v540 = vpop.f32.mrb[0].mxu0
    %v541 = vadd.f32 0.0, %v540
    %v542 = vpop.f32.mrb[0].mxu0
    %v543 = vadd.f32 0.0, %v542
    %v544 = vpop.f32.mrb[0].mxu0
    %v545 = vpop.f32.mrb[0].mxu0
    %546 = vdwg.mxu0
    %v547 = vadd.f32 %v445, %v531
    %v548 = vadd.f32 %v447, %v533
    %v549 = vadd.f32 %v449, %v535
    %v550 = vadd.f32 %v451, %v537
    %v551 = vadd.f32 %v455, %v541
    %v552 = vadd.f32 %v457, %v543
    %s553 = scalar_lea.vmem [#allocation6], 96
    %v554 = vld [vmem:[%s553] sm:$0xff]
    %v555 = vld [vmem:[%s553 + $0x8] sm:$0xff]
    %v556 = vld [vmem:[%s553 + $0x10] sm:$0xff]
    %v557 = vld [vmem:[%s553 + $0x18] sm:$0x33]
    %v562 = vunpack.c.l.b16 %v554
    %v563 = vunpack.c.h.b16 %v554
    %v564 = vunpack.c.l.b16 %v555
    %v565 = vunpack.c.h.b16 %v555
    %v566 = vunpack.c.l.b16 %v556
    %v567 = vunpack.c.h.b16 %v556
    %v568 = vunpack.c.l.b16 %v557
    %v569 = vunpack.c.h.b16 %v557
    %v570 = vpack.c.b16 %v564, %v562
    %v571 = vpack.c.b16 %v565, %v563
    %v572 = vpack.c.b16 %v568, %v566
    %v573 = vpack.c.b16 %v569, %v567
    %v577 = vsel %vm315, %v268, 0
    %v580 = vsel %vm315, %v269, 0
    %v583 = vsel %vm322, %v572, 0
    %v586 = vsel %vm322, %v573, 0
    %588 = vmatprep.subr.bf16.mxu0 %v571
    %589 = vmatpush1.bf16.msra.mxu0 %v570
    %590 = vmatprep.subr.bf16.mxu0 %v586
    %591 = vmatpush1.bf16.msra.mxu0 %v583
    %592 = vmatprep.subr.bf16.mxu0 0
    %593 = vmatpush1.bf16.msra.mxu0 0
    %594 = vmatprep.subr.bf16.mxu0 0
    %595 = vmatpush1.bf16.msra.mxu0 0
    %596 = vmatprep.subr.bf16.mxu0 0
    %597 = vmatpush1.bf16.msra.mxu0 0
    %598 = vmatprep.subr.bf16.mxu0 0
    %599 = vmatpush1.bf16.msra.mxu0 0
    %600 = vmatprep.subr.bf16.mxu0 0
    %601 = vmatpush1.bf16.msra.mxu0 0
    %602 = vmatprep.subr.bf16.mxu0 0
    %603 = vmatpush1.bf16.msra.mxu0 0
    %604 = vmatprep.subr.bf16.mxu0 0
    %605 = vmatpush1.bf16.msra.mxu0 0
    %606 = vmatprep.subr.bf16.mxu0 0
    %607 = vmatpush1.bf16.msra.mxu0 0
    %608 = vmatprep.subr.bf16.mxu0 0
    %609 = vmatpush1.bf16.msra.mxu0 0
    %610 = vmatprep.subr.bf16.mxu0 0
    %611 = vmatpush1.bf16.msra.mxu0 0
    %612 = vmatprep.subr.bf16.mxu0 0
    %613 = vmatpush1.bf16.msra.mxu0 0
    %614 = vmatprep.subr.bf16.mxu0 0
    %615 = vmatpush1.bf16.msra.mxu0 0
    %616 = vmatprep.subr.bf16.mxu0 0
    %617 = vmatpush1.bf16.msra.mxu0 0
    %618 = vmatprep.subr.bf16.mxu0 0
    %619 = vmatpush1.bf16.msra.mxu0 0
    %620 = vmatprep.mubr.bf16.mxu0 0
    %621 = vmatmul.mubr.bf16.gmra.mrb[0].mxu0 %v577
    %v622 = vpop.f32.mrb[0].mxu0
    %v623 = vadd.f32 0.0, %v622
    %v624 = vpop.f32.mrb[0].mxu0
    %v625 = vadd.f32 0.0, %v624
    %v626 = vpop.f32.mrb[0].mxu0
    %v627 = vadd.f32 0.0, %v626
    %v628 = vpop.f32.mrb[0].mxu0
    %v629 = vadd.f32 0.0, %v628
    %630 = vmatprep.mubr.bf16.mxu0 0
    %631 = vmatmul.mubr.bf16.gmra.mrb[0].mxu0 %v580
    %v632 = vpop.f32.mrb[0].mxu0
    %v633 = vadd.f32 0.0, %v632
    %v634 = vpop.f32.mrb[0].mxu0
    %v635 = vadd.f32 0.0, %v634
    %v636 = vpop.f32.mrb[0].mxu0
    %v637 = vpop.f32.mrb[0].mxu0
    %638 = vdwg.mxu0
    %v639 = vadd.f32 %v547, %v623
    %v640 = vadd.f32 %v548, %v625
    %v641 = vadd.f32 %v549, %v627
    %v642 = vadd.f32 %v550, %v629
    %v643 = vadd.f32 %v551, %v633
    %v644 = vadd.f32 %v552, %v635
    %s645 = scalar_lea.vmem [#allocation6], 128
    %v646 = vld [vmem:[%s645] sm:$0xff]
    %v647 = vld [vmem:[%s645 + $0x8] sm:$0xff]
    %v648 = vld [vmem:[%s645 + $0x10] sm:$0xff]
    %v649 = vld [vmem:[%s645 + $0x18] sm:$0x33]
    %v654 = vunpack.c.l.b16 %v646
    %v655 = vunpack.c.h.b16 %v646
    %v656 = vunpack.c.l.b16 %v647
    %v657 = vunpack.c.h.b16 %v647
    %v658 = vunpack.c.l.b16 %v648
    %v659 = vunpack.c.h.b16 %v648
    %v660 = vunpack.c.l.b16 %v649
    %v661 = vunpack.c.h.b16 %v649
    %v662 = vpack.c.b16 %v656, %v654
    %v663 = vpack.c.b16 %v657, %v655
    %v664 = vpack.c.b16 %v660, %v658
    %v665 = vpack.c.b16 %v661, %v659
    %v669 = vsel %vm315, %v231, 0
    %v672 = vsel %vm315, %v232, 0
    %v675 = vsel %vm322, %v664, 0
    %v678 = vsel %vm322, %v665, 0
    %680 = vmatprep.subr.bf16.mxu0 %v663
    %681 = vmatpush1.bf16.msra.mxu0 %v662
    %682 = vmatprep.subr.bf16.mxu0 %v678
    %683 = vmatpush1.bf16.msra.mxu0 %v675
    %684 = vmatprep.subr.bf16.mxu0 0
    %685 = vmatpush1.bf16.msra.mxu0 0
    %686 = vmatprep.subr.bf16.mxu0 0
    %687 = vmatpush1.bf16.msra.mxu0 0
    %688 = vmatprep.subr.bf16.mxu0 0
    %689 = vmatpush1.bf16.msra.mxu0 0
    %690 = vmatprep.subr.bf16.mxu0 0
    %691 = vmatpush1.bf16.msra.mxu0 0
    %692 = vmatprep.subr.bf16.mxu0 0
    %693 = vmatpush1.bf16.msra.mxu0 0
    %694 = vmatprep.subr.bf16.mxu0 0
    %695 = vmatpush1.bf16.msra.mxu0 0
    %696 = vmatprep.subr.bf16.mxu0 0
    %697 = vmatpush1.bf16.msra.mxu0 0
    %698 = vmatprep.subr.bf16.mxu0 0
    %699 = vmatpush1.bf16.msra.mxu0 0
    %700 = vmatprep.subr.bf16.mxu0 0
    %701 = vmatpush1.bf16.msra.mxu0 0
    %702 = vmatprep.subr.bf16.mxu0 0
    %703 = vmatpush1.bf16.msra.mxu0 0
    %704 = vmatprep.subr.bf16.mxu0 0
    %705 = vmatpush1.bf16.msra.mxu0 0
    %706 = vmatprep.subr.bf16.mxu0 0
    %707 = vmatpush1.bf16.msra.mxu0 0
    %708 = vmatprep.subr.bf16.mxu0 0
    %709 = vmatpush1.bf16.msra.mxu0 0
    %710 = vmatprep.subr.bf16.mxu0 0
    %711 = vmatpush1.bf16.msra.mxu0 0
    %712 = vmatprep.mubr.bf16.mxu0 0
    %713 = vmatmul.mubr.bf16.gmra.mrb[0].mxu0 %v669
    %v714 = vpop.f32.mrb[0].mxu0
    %v715 = vadd.f32 0.0, %v714
    %v716 = vpop.f32.mrb[0].mxu0
    %v717 = vadd.f32 0.0, %v716
    %v718 = vpop.f32.mrb[0].mxu0
    %v719 = vadd.f32 0.0, %v718
    %v720 = vpop.f32.mrb[0].mxu0
    %v721 = vadd.f32 0.0, %v720
    %722 = vmatprep.mubr.bf16.mxu0 0
    %723 = vmatmul.mubr.bf16.gmra.mrb[0].mxu0 %v672
    %v724 = vpop.f32.mrb[0].mxu0
    %v725 = vadd.f32 0.0, %v724
    %v726 = vpop.f32.mrb[0].mxu0
    %v727 = vadd.f32 0.0, %v726
    %v728 = vpop.f32.mrb[0].mxu0
    %v729 = vpop.f32.mrb[0].mxu0
    %730 = vdwg.mxu0
    %v731 = vadd.f32 %v639, %v715
    %v732 = vadd.f32 %v640, %v717
    %v733 = vadd.f32 %v641, %v719
    %v734 = vadd.f32 %v642, %v721
    %v735 = vadd.f32 %v643, %v725
    %v736 = vadd.f32 %v644, %v727
    %737 = vmatprep.subr.bf16.mxu0 %v310
    %738 = vmatpush1.bf16.msra.mxu0 %v309
    %739 = vmatprep.subr.bf16.mxu0 %v327
    %740 = vmatpush1.bf16.msra.mxu0 %v324
    %741 = vmatprep.subr.bf16.mxu0 0
    %742 = vmatpush1.bf16.msra.mxu0 0
    %743 = vmatprep.subr.bf16.mxu0 0
    %744 = vmatpush1.bf16.msra.mxu0 0
    %745 = vmatprep.subr.bf16.mxu0 0
    %746 = vmatpush1.bf16.msra.mxu0 0
    %747 = vmatprep.subr.bf16.mxu0 0
    %748 = vmatpush1.bf16.msra.mxu0 0
    %749 = vmatprep.subr.bf16.mxu0 0
    %750 = vmatpush1.bf16.msra.mxu0 0
    %751 = vmatprep.subr.bf16.mxu0 0
    %752 = vmatpush1.bf16.msra.mxu0 0
    %753 = vmatprep.subr.bf16.mxu0 0
    %754 = vmatpush1.bf16.msra.mxu0 0
    %755 = vmatprep.subr.bf16.mxu0 0
    %756 = vmatpush1.bf16.msra.mxu0 0
    %757 = vmatprep.subr.bf16.mxu0 0
    %758 = vmatpush1.bf16.msra.mxu0 0
    %759 = vmatprep.subr.bf16.mxu0 0
    %760 = vmatpush1.bf16.msra.mxu0 0
    %761 = vmatprep.subr.bf16.mxu0 0
    %762 = vmatpush1.bf16.msra.mxu0 0
    %763 = vmatprep.subr.bf16.mxu0 0
    %764 = vmatpush1.bf16.msra.mxu0 0
    %765 = vmatprep.subr.bf16.mxu0 0
    %766 = vmatpush1.bf16.msra.mxu0 0
    %767 = vmatprep.subr.bf16.mxu0 0
    %768 = vmatpush1.bf16.msra.mxu0 0
    %769 = vmatprep.mubr.bf16.mxu0 0
    %770 = vmatmul.mubr.bf16.gmra.mrb[0].mxu0 %v485
    %v771 = vpop.f32.mrb[0].mxu0
    %v772 = vadd.f32 0.0, %v771
    %v773 = vpop.f32.mrb[0].mxu0
    %v774 = vadd.f32 0.0, %v773
    %v775 = vpop.f32.mrb[0].mxu0
    %v776 = vadd.f32 0.0, %v775
    %v777 = vpop.f32.mrb[0].mxu0
    %v778 = vadd.f32 0.0, %v777
    %779 = vmatprep.mubr.bf16.mxu0 0
    %780 = vmatmul.mubr.bf16.gmra.mrb[0].mxu0 %v488
    %v781 = vpop.f32.mrb[0].mxu0
    %v782 = vadd.f32 0.0, %v781
    %v783 = vpop.f32.mrb[0].mxu0
    %v784 = vadd.f32 0.0, %v783
    %v785 = vpop.f32.mrb[0].mxu0
    %v786 = vpop.f32.mrb[0].mxu0
    %787 = vdwg.mxu0
    %788 = vmatprep.subr.bf16.mxu0 %v393
    %789 = vmatpush1.bf16.msra.mxu0 %v392
    %790 = vmatprep.subr.bf16.mxu0 %v408
    %791 = vmatpush1.bf16.msra.mxu0 %v405
    %792 = vmatprep.subr.bf16.mxu0 0
    %793 = vmatpush1.bf16.msra.mxu0 0
    %794 = vmatprep.subr.bf16.mxu0 0
    %795 = vmatpush1.bf16.msra.mxu0 0
    %796 = vmatprep.subr.bf16.mxu0 0
    %797 = vmatpush1.bf16.msra.mxu0 0
    %798 = vmatprep.subr.bf16.mxu0 0
    %799 = vmatpush1.bf16.msra.mxu0 0
    %800 = vmatprep.subr.bf16.mxu0 0
    %801 = vmatpush1.bf16.msra.mxu0 0
    %802 = vmatprep.subr.bf16.mxu0 0
    %803 = vmatpush1.bf16.msra.mxu0 0
    %804 = vmatprep.subr.bf16.mxu0 0
    %805 = vmatpush1.bf16.msra.mxu0 0
    %806 = vmatprep.subr.bf16.mxu0 0
    %807 = vmatpush1.bf16.msra.mxu0 0
    %808 = vmatprep.subr.bf16.mxu0 0
    %809 = vmatpush1.bf16.msra.mxu0 0
    %810 = vmatprep.subr.bf16.mxu0 0
    %811 = vmatpush1.bf16.msra.mxu0 0
    %812 = vmatprep.subr.bf16.mxu0 0
    %813 = vmatpush1.bf16.msra.mxu0 0
    %814 = vmatprep.subr.bf16.mxu0 0
    %815 = vmatpush1.bf16.msra.mxu0 0
    %816 = vmatprep.subr.bf16.mxu0 0
    %817 = vmatpush1.bf16.msra.mxu0 0
    %818 = vmatprep.subr.bf16.mxu0 0
    %819 = vmatpush1.bf16.msra.mxu0 0
    %820 = vmatprep.mubr.bf16.mxu0 0
    %821 = vmatmul.mubr.bf16.gmra.mrb[0].mxu0 %v317
    %v822 = vpop.f32.mrb[0].mxu0
    %v823 = vadd.f32 %v772, %v822
    %v824 = vpop.f32.mrb[0].mxu0
    %v825 = vadd.f32 %v774, %v824
    %v826 = vpop.f32.mrb[0].mxu0
    %v827 = vadd.f32 %v776, %v826
    %v828 = vpop.f32.mrb[0].mxu0
    %v829 = vadd.f32 %v778, %v828
    %830 = vmatprep.mubr.bf16.mxu0 0
    %831 = vmatmul.mubr.bf16.gmra.mrb[0].mxu0 %v320
    %v832 = vpop.f32.mrb[0].mxu0
    %v833 = vadd.f32 %v782, %v832
    %v834 = vpop.f32.mrb[0].mxu0
    %v835 = vadd.f32 %v784, %v834
    %v836 = vpop.f32.mrb[0].mxu0
    %v837 = vpop.f32.mrb[0].mxu0
    %838 = vdwg.mxu0
    %839 = vmatprep.subr.bf16.mxu0 %v479
    %840 = vmatpush1.bf16.msra.mxu0 %v478
    %841 = vmatprep.subr.bf16.mxu0 %v494
    %842 = vmatpush1.bf16.msra.mxu0 %v491
    %843 = vmatprep.subr.bf16.mxu0 0
    %844 = vmatpush1.bf16.msra.mxu0 0
    %845 = vmatprep.subr.bf16.mxu0 0
    %846 = vmatpush1.bf16.msra.mxu0 0
    %847 = vmatprep.subr.bf16.mxu0 0
    %848 = vmatpush1.bf16.msra.mxu0 0
    %849 = vmatprep.subr.bf16.mxu0 0
    %850 = vmatpush1.bf16.msra.mxu0 0
    %851 = vmatprep.subr.bf16.mxu0 0
    %852 = vmatpush1.bf16.msra.mxu0 0
    %853 = vmatprep.subr.bf16.mxu0 0
    %854 = vmatpush1.bf16.msra.mxu0 0
    %855 = vmatprep.subr.bf16.mxu0 0
    %856 = vmatpush1.bf16.msra.mxu0 0
    %857 = vmatprep.subr.bf16.mxu0 0
    %858 = vmatpush1.bf16.msra.mxu0 0
    %859 = vmatprep.subr.bf16.mxu0 0
    %860 = vmatpush1.bf16.msra.mxu0 0
    %861 = vmatprep.subr.bf16.mxu0 0
    %862 = vmatpush1.bf16.msra.mxu0 0
    %863 = vmatprep.subr.bf16.mxu0 0
    %864 = vmatpush1.bf16.msra.mxu0 0
    %865 = vmatprep.subr.bf16.mxu0 0
    %866 = vmatpush1.bf16.msra.mxu0 0
    %867 = vmatprep.subr.bf16.mxu0 0
    %868 = vmatpush1.bf16.msra.mxu0 0
    %869 = vmatprep.subr.bf16.mxu0 0
    %870 = vmatpush1.bf16.msra.mxu0 0
    %871 = vmatprep.mubr.bf16.mxu0 0
    %872 = vmatmul.mubr.bf16.gmra.mrb[0].mxu0 %v577
    %v873 = vpop.f32.mrb[0].mxu0
    %v874 = vadd.f32 0.0, %v873
    %v875 = vpop.f32.mrb[0].mxu0
    %v876 = vadd.f32 0.0, %v875
    %v877 = vpop.f32.mrb[0].mxu0
    %v878 = vadd.f32 0.0, %v877
    %v879 = vpop.f32.mrb[0].mxu0
    %v880 = vadd.f32 0.0, %v879
    %881 = vmatprep.mubr.bf16.mxu0 0
    %882 = vmatmul.mubr.bf16.gmra.mrb[0].mxu0 %v580
    %v883 = vpop.f32.mrb[0].mxu0
    %v884 = vadd.f32 0.0, %v883
    %v885 = vpop.f32.mrb[0].mxu0
    %v886 = vadd.f32 0.0, %v885
    %v887 = vpop.f32.mrb[0].mxu0
    %v888 = vpop.f32.mrb[0].mxu0
    %889 = vdwg.mxu0
    %v890 = vadd.f32 %v823, %v874
    %v891 = vadd.f32 %v825, %v876
    %v892 = vadd.f32 %v827, %v878
    %v893 = vadd.f32 %v829, %v880
    %v894 = vadd.f32 %v833, %v884
    %v895 = vadd.f32 %v835, %v886
    %896 = vmatprep.subr.bf16.mxu0 %v571
    %897 = vmatpush1.bf16.msra.mxu0 %v570
    %898 = vmatprep.subr.bf16.mxu0 %v586
    %899 = vmatpush1.bf16.msra.mxu0 %v583
    %900 = vmatprep.subr.bf16.mxu0 0
    %901 = vmatpush1.bf16.msra.mxu0 0
    %902 = vmatprep.subr.bf16.mxu0 0
    %903 = vmatpush1.bf16.msra.mxu0 0
    %904 = vmatprep.subr.bf16.mxu0 0
    %905 = vmatpush1.bf16.msra.mxu0 0
    %906 = vmatprep.subr.bf16.mxu0 0
    %907 = vmatpush1.bf16.msra.mxu0 0
    %908 = vmatprep.subr.bf16.mxu0 0
    %909 = vmatpush1.bf16.msra.mxu0 0
    %910 = vmatprep.subr.bf16.mxu0 0
    %911 = vmatpush1.bf16.msra.mxu0 0
    %912 = vmatprep.subr.bf16.mxu0 0
    %913 = vmatpush1.bf16.msra.mxu0 0
    %914 = vmatprep.subr.bf16.mxu0 0
    %915 = vmatpush1.bf16.msra.mxu0 0
    %916 = vmatprep.subr.bf16.mxu0 0
    %917 = vmatpush1.bf16.msra.mxu0 0
    %918 = vmatprep.subr.bf16.mxu0 0
    %919 = vmatpush1.bf16.msra.mxu0 0
    %920 = vmatprep.subr.bf16.mxu0 0
    %921 = vmatpush1.bf16.msra.mxu0 0
    %922 = vmatprep.subr.bf16.mxu0 0
    %923 = vmatpush1.bf16.msra.mxu0 0
    %924 = vmatprep.subr.bf16.mxu0 0
    %925 = vmatpush1.bf16.msra.mxu0 0
    %926 = vmatprep.subr.bf16.mxu0 0
    %927 = vmatpush1.bf16.msra.mxu0 0
    %928 = vmatprep.mubr.bf16.mxu0 0
    %929 = vmatmul.mubr.bf16.gmra.mrb[0].mxu0 %v669
    %v930 = vpop.f32.mrb[0].mxu0
    %v931 = vadd.f32 0.0, %v930
    %v932 = vpop.f32.mrb[0].mxu0
    %v933 = vadd.f32 0.0, %v932
    %v934 = vpop.f32.mrb[0].mxu0
    %v935 = vadd.f32 0.0, %v934
    %v936 = vpop.f32.mrb[0].mxu0
    %v937 = vadd.f32 0.0, %v936
    %938 = vmatprep.mubr.bf16.mxu0 0
    %939 = vmatmul.mubr.bf16.gmra.mrb[0].mxu0 %v672
    %v940 = vpop.f32.mrb[0].mxu0
    %v941 = vadd.f32 0.0, %v940
    %v942 = vpop.f32.mrb[0].mxu0
    %v943 = vadd.f32 0.0, %v942
    %v944 = vpop.f32.mrb[0].mxu0
    %v945 = vpop.f32.mrb[0].mxu0
    %946 = vdwg.mxu0
    %v947 = vadd.f32 %v890, %v931
    %v948 = vadd.f32 %v891, %v933
    %v949 = vadd.f32 %v892, %v935
    %v950 = vadd.f32 %v893, %v937
    %v951 = vadd.f32 %v894, %v941
    %v952 = vadd.f32 %v895, %v943
    %v954 = vsel %vm315, %v286, 0
    %v957 = vsel %vm315, %v287, 0
    %959 = vmatprep.subr.bf16.mxu0 %v663
    %960 = vmatpush1.bf16.msra.mxu0 %v662
    %961 = vmatprep.subr.bf16.mxu0 %v678
    %962 = vmatpush1.bf16.msra.mxu0 %v675
    %963 = vmatprep.subr.bf16.mxu0 0
    %964 = vmatpush1.bf16.msra.mxu0 0
    %965 = vmatprep.subr.bf16.mxu0 0
    %966 = vmatpush1.bf16.msra.mxu0 0
    %967 = vmatprep.subr.bf16.mxu0 0
    %968 = vmatpush1.bf16.msra.mxu0 0
    %969 = vmatprep.subr.bf16.mxu0 0
    %970 = vmatpush1.bf16.msra.mxu0 0
    %971 = vmatprep.subr.bf16.mxu0 0
    %972 = vmatpush1.bf16.msra.mxu0 0
    %973 = vmatprep.subr.bf16.mxu0 0
    %974 = vmatpush1.bf16.msra.mxu0 0
    %975 = vmatprep.subr.bf16.mxu0 0
    %976 = vmatpush1.bf16.msra.mxu0 0
    %977 = vmatprep.subr.bf16.mxu0 0
    %978 = vmatpush1.bf16.msra.mxu0 0
    %979 = vmatprep.subr.bf16.mxu0 0
    %980 = vmatpush1.bf16.msra.mxu0 0
    %981 = vmatprep.subr.bf16.mxu0 0
    %982 = vmatpush1.bf16.msra.mxu0 0
    %983 = vmatprep.subr.bf16.mxu0 0
    %984 = vmatpush1.bf16.msra.mxu0 0
    %985 = vmatprep.subr.bf16.mxu0 0
    %986 = vmatpush1.bf16.msra.mxu0 0
    %987 = vmatprep.subr.bf16.mxu0 0
    %988 = vmatpush1.bf16.msra.mxu0 0
    %989 = vmatprep.subr.bf16.mxu0 0
    %990 = vmatpush1.bf16.msra.mxu0 0
    %991 = vmatprep.mubr.bf16.mxu0 0
    %992 = vmatmul.mubr.bf16.gmra.mrb[0].mxu0 %v954
    %v993 = vpop.f32.mrb[0].mxu0
    %v994 = vadd.f32 0.0, %v993
    %v995 = vpop.f32.mrb[0].mxu0
    %v996 = vadd.f32 0.0, %v995
    %v997 = vpop.f32.mrb[0].mxu0
    %v998 = vadd.f32 0.0, %v997
    %v999 = vpop.f32.mrb[0].mxu0
    %v1000 = vadd.f32 0.0, %v999
    %1001 = vmatprep.mubr.bf16.mxu0 0
    %1002 = vmatmul.mubr.bf16.gmra.mrb[0].mxu0 %v957
    %v1003 = vpop.f32.mrb[0].mxu0
    %v1004 = vadd.f32 0.0, %v1003
    %v1005 = vpop.f32.mrb[0].mxu0
    %v1006 = vadd.f32 0.0, %v1005
    %v1007 = vpop.f32.mrb[0].mxu0
    %v1008 = vpop.f32.mrb[0].mxu0
    %1009 = vdwg.mxu0
    %v1010 = vadd.f32 %v947, %v994
    %v1011 = vadd.f32 %v948, %v996
    %v1012 = vadd.f32 %v949, %v998
    %v1013 = vadd.f32 %v950, %v1000
    %v1014 = vadd.f32 %v951, %v1004
    %v1015 = vadd.f32 %v952, %v1006
    %v1016 = vld [vmem:[#allocation8] sm:$0x3]
    %v1018 = vlaneseq
    %v1019 = vshrl.u32 %v1018, 7
    %v1020 = vsub.s32 0, %v1019
    %v1021 = vrot.slane %v1016, %v1020
    %v1022 = vlaneseq
    %v1023 = vshrl.u32 %v1022, 7
    %v1024 = vsub.s32 1, %v1023
    %v1025 = vrot.slane %v1016, %v1024
    %v1028 = vadd.f32 %v731, %v1021
    %v1029 = vadd.f32 %v732, %v1025
    %v1030 = vadd.f32 %v733, %v1021
    %v1031 = vadd.f32 %v734, %v1025
    %v1032 = vadd.f32 %v735, %v1021
    %v1033 = vadd.f32 %v736, %v1025
    %v1034 = vmax.f32 %v1028, 0.0
    %v1035 = vmax.f32 %v1029, 0.0
    %v1036 = vmax.f32 %v1030, 0.0
    %v1037 = vmax.f32 %v1031, 0.0
    %v1038 = vmax.f32 %v1032, 0.0
    %v1039 = vmax.f32 %v1033, 0.0
    %v1040 = vadd.f32 %v1010, %v1021
    %v1041 = vadd.f32 %v1011, %v1025
    %v1042 = vadd.f32 %v1012, %v1021
    %v1043 = vadd.f32 %v1013, %v1025
    %v1044 = vadd.f32 %v1014, %v1021
    %v1045 = vadd.f32 %v1015, %v1025
    %v1046 = vmax.f32 %v1040, 0.0
    %v1047 = vmax.f32 %v1041, 0.0
    %v1048 = vmax.f32 %v1042, 0.0
    %v1049 = vmax.f32 %v1043, 0.0
    %v1050 = vmax.f32 %v1044, 0.0
    %v1051 = vmax.f32 %v1045, 0.0
    %v1052 = vmax.f32 %v1034, %v1046
    %v1053 = vmax.f32 %v1035, %v1047
    %v1054 = vmax.f32 %v1036, %v1048
    %v1055 = vmax.f32 %v1037, %v1049
    %v1056 = vmax.f32 %v1038, %v1050
    %v1057 = vmax.f32 %v1039, %v1051
    %1064 = vrot.lane.b32.xlu0 %v1052, 56
    %v1065 = vpop.permute.xlu0 %1064
    %1066 = vrot.lane.b32.xlu0 %v1053, 56
    %v1067 = vpop.permute.xlu0 %1066
    %1068 = vrot.lane.b32.xlu0 %v1054, 56
    %v1069 = vpop.permute.xlu0 %1068
    %1070 = vrot.lane.b32.xlu0 %v1055, 56
    %v1071 = vpop.permute.xlu0 %1070
    %1072 = vrot.lane.b32.xlu0 %v1056, 56
    %v1073 = vpop.permute.xlu0 %1072
    %1074 = vrot.lane.b32.xlu0 %v1057, 56
    %v1075 = vpop.permute.xlu0 %1074
    %vm1076 = vcmask 457728
    %v1077 = vsel %vm1076, %v1065, %v1067
    %v1078 = vsel %vm1076, %v1069, %v1071
    %v1079 = vsel %vm1076, %v1073, %v1075
    %v1083 = vmax.f32 %v1052, %v1077
    %v1084 = vmax.f32 %v1054, %v1078
    %v1085 = vmax.f32 %v1056, %v1079
    %v1089 = vcombine.high %v1083, %v1083
    %v1090 = vcombine.high %v1084, %v1084
    %v1091 = vcombine.high %v1085, %v1085
    %v1093 = vcombine.low %v1083, %v1089
    %v1094 = vcombine.low %v1090, %v1085
    %vm1097 = vcmask 588800
    %1098 = vst.msk [vmem:[#allocation2] sm:$0xff] %vm1097, %v1093
    %vm1099 = vcmask 584704
    %1100 = vst.msk [vmem:[#allocation2 + $0x8] sm:$0xf] %vm1099, %v1084
    %1101 = vst.msk [vmem:[#allocation2 + $0x10] sm:$0xff] %vm1097, %v1094
    %1102 = vst.msk [vmem:[#allocation2 + $0x18] sm:$0xf] %vm1099, %v1091
    %v1103 = vld [vmem:[#allocation2] sm:$0xff]
    %v1104 = vld [vmem:[#allocation2 + $0x10] sm:$0xff]
    %v1105 = vpack.c.bf16 %v1104, %v1103
    %v1106 = vld [vmem:[#allocation9] sm:$0xf]
    %v1107 = vld [vmem:[#allocation9 + $0x4] sm:$0xf]
    %v1108 = vld [vmem:[#allocation9 + $0x8] sm:$0xf]
    %v1109 = vld [vmem:[#allocation9 + $0xc] sm:$0xf]
    %v1110 = vld [vmem:[#allocation9 + $0x10] sm:$0xf]
    %v1111 = vld [vmem:[#allocation9 + $0x14] sm:$0xf]
    %v1112 = vld [vmem:[#allocation9 + $0x18] sm:$0xf]
    %v1113 = vld [vmem:[#allocation9 + $0x1c] sm:$0xf]
    %v1114 = vld [vmem:[#allocation9 + $0x20] sm:$0xf]
    %v1115 = vld [vmem:[#allocation2 + $0x1] sm:$0xff]
    %v1116 = vld [vmem:[#allocation2 + $0x11] sm:$0xff]
    %v1117 = vpack.c.bf16 %v1116, %v1115
    %s1118 = scalar_lea.vmem [#allocation9], 36
    %v1119 = vld [vmem:[%s1118] sm:$0xf]
    %v1120 = vld [vmem:[%s1118 + $0x4] sm:$0xf]
    %v1121 = vld [vmem:[%s1118 + $0x8] sm:$0xf]
    %v1122 = vld [vmem:[%s1118 + $0xc] sm:$0xf]
    %v1123 = vld [vmem:[%s1118 + $0x10] sm:$0xf]
    %v1124 = vld [vmem:[%s1118 + $0x14] sm:$0xf]
    %v1125 = vld [vmem:[%s1118 + $0x18] sm:$0xf]
    %v1126 = vld [vmem:[%s1118 + $0x1c] sm:$0xf]
    %v1127 = vld [vmem:[%s1118 + $0x20] sm:$0xf]
    %v1137 = vunpack.c.l.b16 %v1119
    %v1138 = vunpack.c.l.b16 %v1120
    %v1139 = vunpack.c.l.b16 %v1121
    %v1140 = vunpack.c.l.b16 %v1122
    %v1141 = vunpack.c.l.b16 %v1123
    %v1142 = vunpack.c.l.b16 %v1124
    %v1143 = vunpack.c.l.b16 %v1125
    %v1144 = vunpack.c.l.b16 %v1126
    %v1145 = vunpack.c.l.b16 %v1127
    %v1146 = vpack.c.b16 %v1138, %v1137
    %v1147 = vpack.c.b16 %v1140, %v1139
    %v1148 = vpack.c.b16 %v1142, %v1141
    %v1149 = vpack.c.b16 %v1144, %v1143
    %v1150 = vpack.c.b16 %v1145, %v1145
    %v1156 = vsel %vm1097, %v1117, 0
    %vm1158 = vcmask 1043456
    %v1160 = vsel %vm1158, %v1150, 0
    %1162 = vmatprep.subr.bf16.mxu0 0
    %1163 = vmatpush1.bf16.msra.mxu0 %v1146
    %1164 = vmatprep.subr.bf16.mxu0 0
    %1165 = vmatpush1.bf16.msra.mxu0 %v1147
    %1166 = vmatprep.subr.bf16.mxu0 0
    %1167 = vmatpush1.bf16.msra.mxu0 %v1148
    %1168 = vmatprep.subr.bf16.mxu0 0
    %1169 = vmatpush1.bf16.msra.mxu0 %v1149
    %1170 = vmatprep.subr.bf16.mxu0 0
    %1171 = vmatpush1.bf16.msra.mxu0 %v1160
    %1172 = vmatprep.subr.bf16.mxu0 0
    %1173 = vmatpush1.bf16.msra.mxu0 0
    %1174 = vmatprep.subr.bf16.mxu0 0
    %1175 = vmatpush1.bf16.msra.mxu0 0
    %1176 = vmatprep.subr.bf16.mxu0 0
    %1177 = vmatpush1.bf16.msra.mxu0 0
    %1178 = vmatprep.subr.bf16.mxu0 0
    %1179 = vmatpush1.bf16.msra.mxu0 0
    %1180 = vmatprep.subr.bf16.mxu0 0
    %1181 = vmatpush1.bf16.msra.mxu0 0
    %1182 = vmatprep.subr.bf16.mxu0 0
    %1183 = vmatpush1.bf16.msra.mxu0 0
    %1184 = vmatprep.subr.bf16.mxu0 0
    %1185 = vmatpush1.bf16.msra.mxu0 0
    %1186 = vmatprep.subr.bf16.mxu0 0
    %1187 = vmatpush1.bf16.msra.mxu0 0
    %1188 = vmatprep.subr.bf16.mxu0 0
    %1189 = vmatpush1.bf16.msra.mxu0 0
    %1190 = vmatprep.subr.bf16.mxu0 0
    %1191 = vmatpush1.bf16.msra.mxu0 0
    %1192 = vmatprep.subr.bf16.mxu0 0
    %1193 = vmatpush1.bf16.msra.mxu0 0
    %1194 = vmatprep.mubr.bf16.mxu0 0
    %1195 = vmatmul.mubr.bf16.gmra.mrb[0].mxu0 %v1156
    %v1196 = vpop.f32.mrb[0].mxu0
    %v1197 = vadd.f32 0.0, %v1196
    %v1198 = vpop.f32.mrb[0].mxu0
    %v1199 = vpop.f32.mrb[0].mxu0
    %v1200 = vadd.f32 0.0, %v1199
    %v1201 = vpop.f32.mrb[0].mxu0
    %1202 = vdwg.mxu0
    %v1212 = vunpack.c.l.b16 %v1106
    %v1213 = vunpack.c.l.b16 %v1107
    %v1214 = vunpack.c.l.b16 %v1108
    %v1215 = vunpack.c.l.b16 %v1109
    %v1216 = vunpack.c.l.b16 %v1110
    %v1217 = vunpack.c.l.b16 %v1111
    %v1218 = vunpack.c.l.b16 %v1112
    %v1219 = vunpack.c.l.b16 %v1113
    %v1220 = vunpack.c.l.b16 %v1114
    %v1221 = vpack.c.b16 %v1213, %v1212
    %v1222 = vpack.c.b16 %v1215, %v1214
    %v1223 = vpack.c.b16 %v1217, %v1216
    %v1224 = vpack.c.b16 %v1219, %v1218
    %v1225 = vpack.c.b16 %v1220, %v1220
    %v1231 = vsel %vm1097, %v1105, 0
    %v1234 = vsel %vm1158, %v1225, 0
    %1236 = vmatprep.subr.bf16.mxu0 0
    %1237 = vmatpush1.bf16.msra.mxu0 %v1221
    %1238 = vmatprep.subr.bf16.mxu0 0
    %1239 = vmatpush1.bf16.msra.mxu0 %v1222
    %1240 = vmatprep.subr.bf16.mxu0 0
    %1241 = vmatpush1.bf16.msra.mxu0 %v1223
    %1242 = vmatprep.subr.bf16.mxu0 0
    %1243 = vmatpush1.bf16.msra.mxu0 %v1224
    %1244 = vmatprep.subr.bf16.mxu0 0
    %1245 = vmatpush1.bf16.msra.mxu0 %v1234
    %1246 = vmatprep.subr.bf16.mxu0 0
    %1247 = vmatpush1.bf16.msra.mxu0 0
    %1248 = vmatprep.subr.bf16.mxu0 0
    %1249 = vmatpush1.bf16.msra.mxu0 0
    %1250 = vmatprep.subr.bf16.mxu0 0
    %1251 = vmatpush1.bf16.msra.mxu0 0
    %1252 = vmatprep.subr.bf16.mxu0 0
    %1253 = vmatpush1.bf16.msra.mxu0 0
    %1254 = vmatprep.subr.bf16.mxu0 0
    %1255 = vmatpush1.bf16.msra.mxu0 0
    %1256 = vmatprep.subr.bf16.mxu0 0
    %1257 = vmatpush1.bf16.msra.mxu0 0
    %1258 = vmatprep.subr.bf16.mxu0 0
    %1259 = vmatpush1.bf16.msra.mxu0 0
    %1260 = vmatprep.subr.bf16.mxu0 0
    %1261 = vmatpush1.bf16.msra.mxu0 0
    %1262 = vmatprep.subr.bf16.mxu0 0
    %1263 = vmatpush1.bf16.msra.mxu0 0
    %1264 = vmatprep.subr.bf16.mxu0 0
    %1265 = vmatpush1.bf16.msra.mxu0 0
    %1266 = vmatprep.subr.bf16.mxu0 0
    %1267 = vmatpush1.bf16.msra.mxu0 0
    %1268 = vmatprep.mubr.bf16.mxu0 0
    %1269 = vmatmul.mubr.bf16.gmra.mrb[0].mxu0 %v1231
    %v1270 = vpop.f32.mrb[0].mxu0
    %v1271 = vadd.f32 %v1197, %v1270
    %v1272 = vpop.f32.mrb[0].mxu0
    %v1273 = vpop.f32.mrb[0].mxu0
    %v1274 = vadd.f32 %v1200, %v1273
    %v1275 = vpop.f32.mrb[0].mxu0
    %1276 = vdwg.mxu0
    %v1277 = vld [vmem:[#allocation2 + $0x2] sm:$0xff]
    %v1278 = vld [vmem:[#allocation2 + $0x12] sm:$0xff]
    %v1279 = vpack.c.bf16 %v1278, %v1277
    %s1280 = scalar_lea.vmem [#allocation9], 72
    %v1281 = vld [vmem:[%s1280] sm:$0xf]
    %v1282 = vld [vmem:[%s1280 + $0x4] sm:$0xf]
    %v1283 = vld [vmem:[%s1280 + $0x8] sm:$0xf]
    %v1284 = vld [vmem:[%s1280 + $0xc] sm:$0xf]
    %v1285 = vld [vmem:[%s1280 + $0x10] sm:$0xf]
    %v1286 = vld [vmem:[%s1280 + $0x14] sm:$0xf]
    %v1287 = vld [vmem:[%s1280 + $0x18] sm:$0xf]
    %v1288 = vld [vmem:[%s1280 + $0x1c] sm:$0xf]
    %v1289 = vld [vmem:[%s1280 + $0x20] sm:$0xf]
    %v1299 = vunpack.c.l.b16 %v1281
    %v1300 = vunpack.c.l.b16 %v1282
    %v1301 = vunpack.c.l.b16 %v1283
    %v1302 = vunpack.c.l.b16 %v1284
    %v1303 = vunpack.c.l.b16 %v1285
    %v1304 = vunpack.c.l.b16 %v1286
    %v1305 = vunpack.c.l.b16 %v1287
    %v1306 = vunpack.c.l.b16 %v1288
    %v1307 = vunpack.c.l.b16 %v1289
    %v1308 = vpack.c.b16 %v1300, %v1299
    %v1309 = vpack.c.b16 %v1302, %v1301
    %v1310 = vpack.c.b16 %v1304, %v1303
    %v1311 = vpack.c.b16 %v1306, %v1305
    %v1312 = vpack.c.b16 %v1307, %v1307
    %v1318 = vsel %vm1097, %v1279, 0
    %v1321 = vsel %vm1158, %v1312, 0
    %1323 = vmatprep.subr.bf16.mxu0 0
    %1324 = vmatpush1.bf16.msra.mxu0 %v1308
    %1325 = vmatprep.subr.bf16.mxu0 0
    %1326 = vmatpush1.bf16.msra.mxu0 %v1309
    %1327 = vmatprep.subr.bf16.mxu0 0
    %1328 = vmatpush1.bf16.msra.mxu0 %v1310
    %1329 = vmatprep.subr.bf16.mxu0 0
    %1330 = vmatpush1.bf16.msra.mxu0 %v1311
    %1331 = vmatprep.subr.bf16.mxu0 0
    %1332 = vmatpush1.bf16.msra.mxu0 %v1321
    %1333 = vmatprep.subr.bf16.mxu0 0
    %1334 = vmatpush1.bf16.msra.mxu0 0
    %1335 = vmatprep.subr.bf16.mxu0 0
    %1336 = vmatpush1.bf16.msra.mxu0 0
    %1337 = vmatprep.subr.bf16.mxu0 0
    %1338 = vmatpush1.bf16.msra.mxu0 0
    %1339 = vmatprep.subr.bf16.mxu0 0
    %1340 = vmatpush1.bf16.msra.mxu0 0
    %1341 = vmatprep.subr.bf16.mxu0 0
    %1342 = vmatpush1.bf16.msra.mxu0 0
    %1343 = vmatprep.subr.bf16.mxu0 0
    %1344 = vmatpush1.bf16.msra.mxu0 0
    %1345 = vmatprep.subr.bf16.mxu0 0
    %1346 = vmatpush1.bf16.msra.mxu0 0
    %1347 = vmatprep.subr.bf16.mxu0 0
    %1348 = vmatpush1.bf16.msra.mxu0 0
    %1349 = vmatprep.subr.bf16.mxu0 0
    %1350 = vmatpush1.bf16.msra.mxu0 0
    %1351 = vmatprep.subr.bf16.mxu0 0
    %1352 = vmatpush1.bf16.msra.mxu0 0
    %1353 = vmatprep.subr.bf16.mxu0 0
    %1354 = vmatpush1.bf16.msra.mxu0 0
    %1355 = vmatprep.mubr.bf16.mxu0 0
    %1356 = vmatmul.mubr.bf16.gmra.mrb[0].mxu0 %v1318
    %v1357 = vpop.f32.mrb[0].mxu0
    %v1358 = vadd.f32 0.0, %v1357
    %v1359 = vpop.f32.mrb[0].mxu0
    %v1360 = vpop.f32.mrb[0].mxu0
    %v1361 = vadd.f32 0.0, %v1360
    %v1362 = vpop.f32.mrb[0].mxu0
    %1363 = vdwg.mxu0
    %v1364 = vadd.f32 %v1271, %v1358
    %v1365 = vadd.f32 %v1274, %v1361
    %v1366 = vld [vmem:[#allocation2 + $0x3] sm:$0xff]
    %v1367 = vld [vmem:[#allocation2 + $0x13] sm:$0xff]
    %v1368 = vpack.c.bf16 %v1367, %v1366
    %s1369 = scalar_lea.vmem [#allocation9], 108
    %v1370 = vld [vmem:[%s1369] sm:$0xf]
    %v1371 = vld [vmem:[%s1369 + $0x4] sm:$0xf]
    %v1372 = vld [vmem:[%s1369 + $0x8] sm:$0xf]
    %v1373 = vld [vmem:[%s1369 + $0xc] sm:$0xf]
    %v1374 = vld [vmem:[%s1369 + $0x10] sm:$0xf]
    %v1375 = vld [vmem:[%s1369 + $0x14] sm:$0xf]
    %v1376 = vld [vmem:[%s1369 + $0x18] sm:$0xf]
    %v1377 = vld [vmem:[%s1369 + $0x1c] sm:$0xf]
    %v1378 = vld [vmem:[%s1369 + $0x20] sm:$0xf]
    %v1388 = vunpack.c.l.b16 %v1370
    %v1389 = vunpack.c.l.b16 %v1371
    %v1390 = vunpack.c.l.b16 %v1372
    %v1391 = vunpack.c.l.b16 %v1373
    %v1392 = vunpack.c.l.b16 %v1374
    %v1393 = vunpack.c.l.b16 %v1375
    %v1394 = vunpack.c.l.b16 %v1376
    %v1395 = vunpack.c.l.b16 %v1377
    %v1396 = vunpack.c.l.b16 %v1378
    %v1397 = vpack.c.b16 %v1389, %v1388
    %v1398 = vpack.c.b16 %v1391, %v1390
    %v1399 = vpack.c.b16 %v1393, %v1392
    %v1400 = vpack.c.b16 %v1395, %v1394
    %v1401 = vpack.c.b16 %v1396, %v1396
    %v1407 = vsel %vm1097, %v1368, 0
    %v1410 = vsel %vm1158, %v1401, 0
    %1412 = vmatprep.subr.bf16.mxu0 0
    %1413 = vmatpush1.bf16.msra.mxu0 %v1397
    %1414 = vmatprep.subr.bf16.mxu0 0
    %1415 = vmatpush1.bf16.msra.mxu0 %v1398
    %1416 = vmatprep.subr.bf16.mxu0 0
    %1417 = vmatpush1.bf16.msra.mxu0 %v1399
    %1418 = vmatprep.subr.bf16.mxu0 0
    %1419 = vmatpush1.bf16.msra.mxu0 %v1400
    %1420 = vmatprep.subr.bf16.mxu0 0
    %1421 = vmatpush1.bf16.msra.mxu0 %v1410
    %1422 = vmatprep.subr.bf16.mxu0 0
    %1423 = vmatpush1.bf16.msra.mxu0 0
    %1424 = vmatprep.subr.bf16.mxu0 0
    %1425 = vmatpush1.bf16.msra.mxu0 0
    %1426 = vmatprep.subr.bf16.mxu0 0
    %1427 = vmatpush1.bf16.msra.mxu0 0
    %1428 = vmatprep.subr.bf16.mxu0 0
    %1429 = vmatpush1.bf16.msra.mxu0 0
    %1430 = vmatprep.subr.bf16.mxu0 0
    %1431 = vmatpush1.bf16.msra.mxu0 0
    %1432 = vmatprep.subr.bf16.mxu0 0
    %1433 = vmatpush1.bf16.msra.mxu0 0
    %1434 = vmatprep.subr.bf16.mxu0 0
    %1435 = vmatpush1.bf16.msra.mxu0 0
    %1436 = vmatprep.subr.bf16.mxu0 0
    %1437 = vmatpush1.bf16.msra.mxu0 0
    %1438 = vmatprep.subr.bf16.mxu0 0
    %1439 = vmatpush1.bf16.msra.mxu0 0
    %1440 = vmatprep.subr.bf16.mxu0 0
    %1441 = vmatpush1.bf16.msra.mxu0 0
    %1442 = vmatprep.subr.bf16.mxu0 0
    %1443 = vmatpush1.bf16.msra.mxu0 0
    %1444 = vmatprep.mubr.bf16.mxu0 0
    %1445 = vmatmul.mubr.bf16.gmra.mrb[0].mxu0 %v1407
    %v1446 = vpop.f32.mrb[0].mxu0
    %v1447 = vadd.f32 0.0, %v1446
    %v1448 = vpop.f32.mrb[0].mxu0
    %v1449 = vpop.f32.mrb[0].mxu0
    %v1450 = vadd.f32 0.0, %v1449
    %v1451 = vpop.f32.mrb[0].mxu0
    %1452 = vdwg.mxu0
    %v1453 = vadd.f32 %v1364, %v1447
    %v1454 = vadd.f32 %v1365, %v1450
    %v1455 = vld [vmem:[#allocation2 + $0x4] sm:$0xff]
    %v1456 = vld [vmem:[#allocation2 + $0x14] sm:$0xff]
    %v1457 = vpack.c.bf16 %v1456, %v1455
    %s1458 = scalar_lea.vmem [#allocation9], 144
    %v1459 = vld [vmem:[%s1458] sm:$0xf]
    %v1460 = vld [vmem:[%s1458 + $0x4] sm:$0xf]
    %v1461 = vld [vmem:[%s1458 + $0x8] sm:$0xf]
    %v1462 = vld [vmem:[%s1458 + $0xc] sm:$0xf]
    %v1463 = vld [vmem:[%s1458 + $0x10] sm:$0xf]
    %v1464 = vld [vmem:[%s1458 + $0x14] sm:$0xf]
    %v1465 = vld [vmem:[%s1458 + $0x18] sm:$0xf]
    %v1466 = vld [vmem:[%s1458 + $0x1c] sm:$0xf]
    %v1467 = vld [vmem:[%s1458 + $0x20] sm:$0xf]
    %v1477 = vunpack.c.l.b16 %v1459
    %v1478 = vunpack.c.l.b16 %v1460
    %v1479 = vunpack.c.l.b16 %v1461
    %v1480 = vunpack.c.l.b16 %v1462
    %v1481 = vunpack.c.l.b16 %v1463
    %v1482 = vunpack.c.l.b16 %v1464
    %v1483 = vunpack.c.l.b16 %v1465
    %v1484 = vunpack.c.l.b16 %v1466
    %v1485 = vunpack.c.l.b16 %v1467
    %v1486 = vpack.c.b16 %v1478, %v1477
    %v1487 = vpack.c.b16 %v1480, %v1479
    %v1488 = vpack.c.b16 %v1482, %v1481
    %v1489 = vpack.c.b16 %v1484, %v1483
    %v1490 = vpack.c.b16 %v1485, %v1485
    %v1496 = vsel %vm1097, %v1457, 0
    %v1499 = vsel %vm1158, %v1490, 0
    %1501 = vmatprep.subr.bf16.mxu0 0
    %1502 = vmatpush1.bf16.msra.mxu0 %v1486
    %1503 = vmatprep.subr.bf16.mxu0 0
    %1504 = vmatpush1.bf16.msra.mxu0 %v1487
    %1505 = vmatprep.subr.bf16.mxu0 0
    %1506 = vmatpush1.bf16.msra.mxu0 %v1488
    %1507 = vmatprep.subr.bf16.mxu0 0
    %1508 = vmatpush1.bf16.msra.mxu0 %v1489
    %1509 = vmatprep.subr.bf16.mxu0 0
    %1510 = vmatpush1.bf16.msra.mxu0 %v1499
    %1511 = vmatprep.subr.bf16.mxu0 0
    %1512 = vmatpush1.bf16.msra.mxu0 0
    %1513 = vmatprep.subr.bf16.mxu0 0
    %1514 = vmatpush1.bf16.msra.mxu0 0
    %1515 = vmatprep.subr.bf16.mxu0 0
    %1516 = vmatpush1.bf16.msra.mxu0 0
    %1517 = vmatprep.subr.bf16.mxu0 0
    %1518 = vmatpush1.bf16.msra.mxu0 0
    %1519 = vmatprep.subr.bf16.mxu0 0
    %1520 = vmatpush1.bf16.msra.mxu0 0
    %1521 = vmatprep.subr.bf16.mxu0 0
    %1522 = vmatpush1.bf16.msra.mxu0 0
    %1523 = vmatprep.subr.bf16.mxu0 0
    %1524 = vmatpush1.bf16.msra.mxu0 0
    %1525 = vmatprep.subr.bf16.mxu0 0
    %1526 = vmatpush1.bf16.msra.mxu0 0
    %1527 = vmatprep.subr.bf16.mxu0 0
    %1528 = vmatpush1.bf16.msra.mxu0 0
    %1529 = vmatprep.subr.bf16.mxu0 0
    %1530 = vmatpush1.bf16.msra.mxu0 0
    %1531 = vmatprep.subr.bf16.mxu0 0
    %1532 = vmatpush1.bf16.msra.mxu0 0
    %1533 = vmatprep.mubr.bf16.mxu0 0
    %1534 = vmatmul.mubr.bf16.gmra.mrb[0].mxu0 %v1496
    %v1535 = vpop.f32.mrb[0].mxu0
    %v1536 = vadd.f32 0.0, %v1535
    %v1537 = vpop.f32.mrb[0].mxu0
    %v1538 = vpop.f32.mrb[0].mxu0
    %v1539 = vadd.f32 0.0, %v1538
    %v1540 = vpop.f32.mrb[0].mxu0
    %1541 = vdwg.mxu0
    %v1542 = vadd.f32 %v1453, %v1536
    %v1543 = vadd.f32 %v1454, %v1539
    %v1544 = vld [vmem:[#allocation11] sm:$0x1]
    %v1546 = vlaneseq
    %v1547 = vshrl.u32 %v1546, 7
    %v1548 = vsub.s32 0, %v1547
    %v1549 = vrot.slane %v1544, %v1548
    %v1551 = vadd.f32 %v1542, %v1549
    %v1552 = vadd.f32 %v1543, %v1549
    %v1553 = vmax.f32 %v1551, 0.0
    %v1554 = vmax.f32 %v1552, 0.0
    %1557 = vrot.lane.b32.xlu0 %v1553, 64
    %v1558 = vpop.permute.xlu0 %1557
    %1559 = vrot.lane.b32.xlu0 %v1554, 64
    %v1560 = vpop.permute.xlu0 %1559
    %v1563 = vmax.f32 %v1553, %v1558
    %v1564 = vmax.f32 %v1554, %v1560
    %v1565 = vld [vmem:[#allocation14] sm:$0x1]
    %v1568 = vrot.slane %v1563, 1
    %v1569 = vrot.slane %v1564, 1
    %v1572 = vmax.f32 %v1563, %v1568
    %v1573 = vmax.f32 %v1564, %v1569
    %v1574 = vpack.c.bf16 %v1572, %v1572
    %v1575 = vpack.c.bf16 %v1573, %v1573
    %v1576 = vld [vmem:[#allocation12] sm:$0xf]
    %v1577 = vld [vmem:[#allocation12 + $0x4] sm:$0xf]
    %v1578 = vld [vmem:[#allocation12 + $0x8] sm:$0xf]
    %v1579 = vld [vmem:[#allocation12 + $0xc] sm:$0xf]
    %v1580 = vld [vmem:[#allocation12 + $0x10] sm:$0xf]
    %v1581 = vld [vmem:[#allocation12 + $0x14] sm:$0xf]
    %v1582 = vld [vmem:[#allocation12 + $0x18] sm:$0xf]
    %v1583 = vld [vmem:[#allocation12 + $0x1c] sm:$0xf]
    %v1586 = vunpack.c.l.b16 %v1574
    %v1587 = vunpack.c.l.b16 %v1575
    %v1588 = vrot.slane %v1587, 7
    %vm1589 = vcmask 1041409
    %v1590 = vsel %vm1589, %v1588, %v1586
    %v1591 = vpack.c.b16 %v1590, %v1590
    %v1600 = vunpack.c.l.b16 %v1576
    %v1601 = vunpack.c.l.b16 %v1577
    %v1602 = vunpack.c.l.b16 %v1578
    %v1603 = vunpack.c.l.b16 %v1579
    %v1604 = vunpack.c.l.b16 %v1580
    %v1605 = vunpack.c.l.b16 %v1581
    %v1606 = vunpack.c.l.b16 %v1582
    %v1607 = vunpack.c.l.b16 %v1583
    %v1608 = vpack.c.b16 %v1601, %v1600
    %v1609 = vpack.c.b16 %v1603, %v1602
    %v1610 = vpack.c.b16 %v1605, %v1604
    %v1611 = vpack.c.b16 %v1607, %v1606
    %vm1616 = vcmask 523264
    %v1618 = vsel %vm1616, %v1591, 0
    %1620 = vmatprep.subr.bf16.mxu0 0
    %1621 = vmatpush1.bf16.msra.mxu0 %v1608
    %1622 = vmatprep.subr.bf16.mxu0 0
    %1623 = vmatpush1.bf16.msra.mxu0 %v1609
    %1624 = vmatprep.subr.bf16.mxu0 0
    %1625 = vmatpush1.bf16.msra.mxu0 %v1610
    %1626 = vmatprep.subr.bf16.mxu0 0
    %1627 = vmatpush1.bf16.msra.mxu0 %v1611
    %1628 = vmatprep.subr.bf16.mxu0 0
    %1629 = vmatpush1.bf16.msra.mxu0 0
    %1630 = vmatprep.subr.bf16.mxu0 0
    %1631 = vmatpush1.bf16.msra.mxu0 0
    %1632 = vmatprep.subr.bf16.mxu0 0
    %1633 = vmatpush1.bf16.msra.mxu0 0
    %1634 = vmatprep.subr.bf16.mxu0 0
    %1635 = vmatpush1.bf16.msra.mxu0 0
    %1636 = vmatprep.subr.bf16.mxu0 0
    %1637 = vmatpush1.bf16.msra.mxu0 0
    %1638 = vmatprep.subr.bf16.mxu0 0
    %1639 = vmatpush1.bf16.msra.mxu0 0
    %1640 = vmatprep.subr.bf16.mxu0 0
    %1641 = vmatpush1.bf16.msra.mxu0 0
    %1642 = vmatprep.subr.bf16.mxu0 0
    %1643 = vmatpush1.bf16.msra.mxu0 0
    %1644 = vmatprep.subr.bf16.mxu0 0
    %1645 = vmatpush1.bf16.msra.mxu0 0
    %1646 = vmatprep.subr.bf16.mxu0 0
    %1647 = vmatpush1.bf16.msra.mxu0 0
    %1648 = vmatprep.subr.bf16.mxu0 0
    %1649 = vmatpush1.bf16.msra.mxu0 0
    %1650 = vmatprep.subr.bf16.mxu0 0
    %1651 = vmatpush1.bf16.msra.mxu0 0
    %1652 = vmatprep.mubr.bf16.mxu0 0
    %1653 = vmatmul.mubr.bf16.gmra.mrb[0].mxu0 %v1618
    %v1654 = vpop.f32.mrb[0].mxu0
    %v1655 = vadd.f32 0.0, %v1654
    %v1656 = vpop.f32.mrb[0].mxu0
    %v1657 = vpop.f32.mrb[0].mxu0
    %v1658 = vpop.f32.mrb[0].mxu0
    %1659 = vdwg.mxu0
    %v1661 = vlaneseq
    %v1662 = vshrl.u32 %v1661, 7
    %v1663 = vsub.s32 0, %v1662
    %v1664 = vrot.slane %v1565, %v1663
    %v1666 = vadd.f32 %v1664, %v1655
    %s1667 = scalar_lea.vmem [#allocation12], 32
    %v1668 = vld [vmem:[%s1667] sm:$0xf]
    %v1669 = vld [vmem:[%s1667 + $0x4] sm:$0xf]
    %v1670 = vld [vmem:[%s1667 + $0x8] sm:$0xf]
    %v1671 = vld [vmem:[%s1667 + $0xc] sm:$0xf]
    %v1672 = vld [vmem:[%s1667 + $0x10] sm:$0xf]
    %v1673 = vld [vmem:[%s1667 + $0x14] sm:$0xf]
    %v1674 = vld [vmem:[%s1667 + $0x18] sm:$0xf]
    %v1675 = vld [vmem:[%s1667 + $0x1c] sm:$0xf]
    %v1676 = vrot.slane %v1586, 2
    %v1677 = vrot.slane %v1587, 1
    %v1678 = vsel %vm1589, %v1677, %v1676
    %v1679 = vpack.c.b16 %v1678, %v1678
    %v1688 = vunpack.c.l.b16 %v1668
    %v1689 = vunpack.c.l.b16 %v1669
    %v1690 = vunpack.c.l.b16 %v1670
    %v1691 = vunpack.c.l.b16 %v1671
    %v1692 = vunpack.c.l.b16 %v1672
    %v1693 = vunpack.c.l.b16 %v1673
    %v1694 = vunpack.c.l.b16 %v1674
    %v1695 = vunpack.c.l.b16 %v1675
    %v1696 = vpack.c.b16 %v1689, %v1688
    %v1697 = vpack.c.b16 %v1691, %v1690
    %v1698 = vpack.c.b16 %v1693, %v1692
    %v1699 = vpack.c.b16 %v1695, %v1694
    %v1705 = vsel %vm1616, %v1679, 0
    %1707 = vmatprep.subr.bf16.mxu0 0
    %1708 = vmatpush1.bf16.msra.mxu0 %v1696
    %1709 = vmatprep.subr.bf16.mxu0 0
    %1710 = vmatpush1.bf16.msra.mxu0 %v1697
    %1711 = vmatprep.subr.bf16.mxu0 0
    %1712 = vmatpush1.bf16.msra.mxu0 %v1698
    %1713 = vmatprep.subr.bf16.mxu0 0
    %1714 = vmatpush1.bf16.msra.mxu0 %v1699
    %1715 = vmatprep.subr.bf16.mxu0 0
    %1716 = vmatpush1.bf16.msra.mxu0 0
    %1717 = vmatprep.subr.bf16.mxu0 0
    %1718 = vmatpush1.bf16.msra.mxu0 0
    %1719 = vmatprep.subr.bf16.mxu0 0
    %1720 = vmatpush1.bf16.msra.mxu0 0
    %1721 = vmatprep.subr.bf16.mxu0 0
    %1722 = vmatpush1.bf16.msra.mxu0 0
    %1723 = vmatprep.subr.bf16.mxu0 0
    %1724 = vmatpush1.bf16.msra.mxu0 0
    %1725 = vmatprep.subr.bf16.mxu0 0
    %1726 = vmatpush1.bf16.msra.mxu0 0
    %1727 = vmatprep.subr.bf16.mxu0 0
    %1728 = vmatpush1.bf16.msra.mxu0 0
    %1729 = vmatprep.subr.bf16.mxu0 0
    %1730 = vmatpush1.bf16.msra.mxu0 0
    %1731 = vmatprep.subr.bf16.mxu0 0
    %1732 = vmatpush1.bf16.msra.mxu0 0
    %1733 = vmatprep.subr.bf16.mxu0 0
    %1734 = vmatpush1.bf16.msra.mxu0 0
    %1735 = vmatprep.subr.bf16.mxu0 0
    %1736 = vmatpush1.bf16.msra.mxu0 0
    %1737 = vmatprep.subr.bf16.mxu0 0
    %1738 = vmatpush1.bf16.msra.mxu0 0
    %1739 = vmatprep.mubr.bf16.mxu0 0
    %1740 = vmatmul.mubr.bf16.gmra.mrb[0].mxu0 %v1705
    %v1741 = vpop.f32.mrb[0].mxu0
    %v1742 = vadd.f32 0.0, %v1741
    %v1743 = vpop.f32.mrb[0].mxu0
    %v1744 = vpop.f32.mrb[0].mxu0
    %v1745 = vpop.f32.mrb[0].mxu0
    %1746 = vdwg.mxu0
    %v1747 = vadd.f32 %v1666, %v1742
    %s1748 = scalar_lea.vmem [#allocation12], 64
    %v1749 = vld [vmem:[%s1748] sm:$0xf]
    %v1750 = vld [vmem:[%s1748 + $0x4] sm:$0xf]
    %v1751 = vld [vmem:[%s1748 + $0x8] sm:$0xf]
    %v1752 = vld [vmem:[%s1748 + $0xc] sm:$0xf]
    %v1753 = vld [vmem:[%s1748 + $0x10] sm:$0xf]
    %v1754 = vld [vmem:[%s1748 + $0x14] sm:$0xf]
    %v1755 = vld [vmem:[%s1748 + $0x18] sm:$0xf]
    %v1756 = vld [vmem:[%s1748 + $0x1c] sm:$0xf]
    %v1757 = vrot.slane %v1586, 4
    %v1758 = vrot.slane %v1587, 3
    %v1759 = vsel %vm1589, %v1758, %v1757
    %v1760 = vpack.c.b16 %v1759, %v1759
    %v1769 = vunpack.c.l.b16 %v1749
    %v1770 = vunpack.c.l.b16 %v1750
    %v1771 = vunpack.c.l.b16 %v1751
    %v1772 = vunpack.c.l.b16 %v1752
    %v1773 = vunpack.c.l.b16 %v1753
    %v1774 = vunpack.c.l.b16 %v1754
    %v1775 = vunpack.c.l.b16 %v1755
    %v1776 = vunpack.c.l.b16 %v1756
    %v1777 = vpack.c.b16 %v1770, %v1769
    %v1778 = vpack.c.b16 %v1772, %v1771
    %v1779 = vpack.c.b16 %v1774, %v1773
    %v1780 = vpack.c.b16 %v1776, %v1775
    %v1786 = vsel %vm1616, %v1760, 0
    %1788 = vmatprep.subr.bf16.mxu0 0
    %1789 = vmatpush1.bf16.msra.mxu0 %v1777
    %1790 = vmatprep.subr.bf16.mxu0 0
    %1791 = vmatpush1.bf16.msra.mxu0 %v1778
    %1792 = vmatprep.subr.bf16.mxu0 0
    %1793 = vmatpush1.bf16.msra.mxu0 %v1779
    %1794 = vmatprep.subr.bf16.mxu0 0
    %1795 = vmatpush1.bf16.msra.mxu0 %v1780
    %1796 = vmatprep.subr.bf16.mxu0 0
    %1797 = vmatpush1.bf16.msra.mxu0 0
    %1798 = vmatprep.subr.bf16.mxu0 0
    %1799 = vmatpush1.bf16.msra.mxu0 0
    %1800 = vmatprep.subr.bf16.mxu0 0
    %1801 = vmatpush1.bf16.msra.mxu0 0
    %1802 = vmatprep.subr.bf16.mxu0 0
    %1803 = vmatpush1.bf16.msra.mxu0 0
    %1804 = vmatprep.subr.bf16.mxu0 0
    %1805 = vmatpush1.bf16.msra.mxu0 0
    %1806 = vmatprep.subr.bf16.mxu0 0
    %1807 = vmatpush1.bf16.msra.mxu0 0
    %1808 = vmatprep.subr.bf16.mxu0 0
    %1809 = vmatpush1.bf16.msra.mxu0 0
    %1810 = vmatprep.subr.bf16.mxu0 0
    %1811 = vmatpush1.bf16.msra.mxu0 0
    %1812 = vmatprep.subr.bf16.mxu0 0
    %1813 = vmatpush1.bf16.msra.mxu0 0
    %1814 = vmatprep.subr.bf16.mxu0 0
    %1815 = vmatpush1.bf16.msra.mxu0 0
    %1816 = vmatprep.subr.bf16.mxu0 0
    %1817 = vmatpush1.bf16.msra.mxu0 0
    %1818 = vmatprep.subr.bf16.mxu0 0
    %1819 = vmatpush1.bf16.msra.mxu0 0
    %1820 = vmatprep.mubr.bf16.mxu0 0
    %1821 = vmatmul.mubr.bf16.gmra.mrb[0].mxu0 %v1786
    %v1822 = vpop.f32.mrb[0].mxu0
    %v1823 = vadd.f32 0.0, %v1822
    %v1824 = vpop.f32.mrb[0].mxu0
    %v1825 = vpop.f32.mrb[0].mxu0
    %v1826 = vpop.f32.mrb[0].mxu0
    %1827 = vdwg.mxu0
    %v1828 = vadd.f32 %v1747, %v1823
    %s1829 = scalar_lea.vmem [#allocation12], 96
    %v1830 = vld [vmem:[%s1829] sm:$0xf]
    %v1831 = vld [vmem:[%s1829 + $0x4] sm:$0xf]
    %v1832 = vld [vmem:[%s1829 + $0x8] sm:$0xf]
    %v1833 = vld [vmem:[%s1829 + $0xc] sm:$0xf]
    %v1834 = vld [vmem:[%s1829 + $0x10] sm:$0xf]
    %v1835 = vld [vmem:[%s1829 + $0x14] sm:$0xf]
    %v1836 = vld [vmem:[%s1829 + $0x18] sm:$0xf]
    %v1837 = vld [vmem:[%s1829 + $0x1c] sm:$0xf]
    %v1838 = vrot.slane %v1586, 6
    %v1839 = vrot.slane %v1587, 5
    %v1840 = vsel %vm1589, %v1839, %v1838
    %v1841 = vpack.c.b16 %v1840, %v1840
    %v1850 = vunpack.c.l.b16 %v1830
    %v1851 = vunpack.c.l.b16 %v1831
    %v1852 = vunpack.c.l.b16 %v1832
    %v1853 = vunpack.c.l.b16 %v1833
    %v1854 = vunpack.c.l.b16 %v1834
    %v1855 = vunpack.c.l.b16 %v1835
    %v1856 = vunpack.c.l.b16 %v1836
    %v1857 = vunpack.c.l.b16 %v1837
    %v1858 = vpack.c.b16 %v1851, %v1850
    %v1859 = vpack.c.b16 %v1853, %v1852
    %v1860 = vpack.c.b16 %v1855, %v1854
    %v1861 = vpack.c.b16 %v1857, %v1856
    %v1867 = vsel %vm1616, %v1841, 0
    %1869 = vmatprep.subr.bf16.mxu0 0
    %1870 = vmatpush1.bf16.msra.mxu0 %v1858
    %1871 = vmatprep.subr.bf16.mxu0 0
    %1872 = vmatpush1.bf16.msra.mxu0 %v1859
    %1873 = vmatprep.subr.bf16.mxu0 0
    %1874 = vmatpush1.bf16.msra.mxu0 %v1860
    %1875 = vmatprep.subr.bf16.mxu0 0
    %1876 = vmatpush1.bf16.msra.mxu0 %v1861
    %1877 = vmatprep.subr.bf16.mxu0 0
    %1878 = vmatpush1.bf16.msra.mxu0 0
    %1879 = vmatprep.subr.bf16.mxu0 0
    %1880 = vmatpush1.bf16.msra.mxu0 0
    %1881 = vmatprep.subr.bf16.mxu0 0
    %1882 = vmatpush1.bf16.msra.mxu0 0
    %1883 = vmatprep.subr.bf16.mxu0 0
    %1884 = vmatpush1.bf16.msra.mxu0 0
    %1885 = vmatprep.subr.bf16.mxu0 0
    %1886 = vmatpush1.bf16.msra.mxu0 0
    %1887 = vmatprep.subr.bf16.mxu0 0
    %1888 = vmatpush1.bf16.msra.mxu0 0
    %1889 = vmatprep.subr.bf16.mxu0 0
    %1890 = vmatpush1.bf16.msra.mxu0 0
    %1891 = vmatprep.subr.bf16.mxu0 0
    %1892 = vmatpush1.bf16.msra.mxu0 0
    %1893 = vmatprep.subr.bf16.mxu0 0
    %1894 = vmatpush1.bf16.msra.mxu0 0
    %1895 = vmatprep.subr.bf16.mxu0 0
    %1896 = vmatpush1.bf16.msra.mxu0 0
    %1897 = vmatprep.subr.bf16.mxu0 0
    %1898 = vmatpush1.bf16.msra.mxu0 0
    %1899 = vmatprep.subr.bf16.mxu0 0
    %1900 = vmatpush1.bf16.msra.mxu0 0
    %1901 = vmatprep.mubr.bf16.mxu0 0
    %1902 = vmatmul.mubr.bf16.gmra.mrb[0].mxu0 %v1867
    %v1903 = vpop.f32.mrb[0].mxu0
    %v1904 = vadd.f32 0.0, %v1903
    %v1905 = vpop.f32.mrb[0].mxu0
    %v1906 = vpop.f32.mrb[0].mxu0
    %v1907 = vpop.f32.mrb[0].mxu0
    %1908 = vdwg.mxu0
    %v1909 = vadd.f32 %v1828, %v1904
    %v1910 = vmax.f32 %v1909, 0.0
    %v1911 = vpack.c.bf16 %v1910, %v1910
    %v1912 = vld [vmem:[#allocation15] sm:$0xf]
    %v1913 = vld [vmem:[#allocation15 + $0x4] sm:$0xf]
    %v1914 = vld [vmem:[#allocation15 + $0x8] sm:$0xf]
    %v1915 = vld [vmem:[#allocation15 + $0xc] sm:$0xf]
    %v1916 = vld [vmem:[#allocation15 + $0x10] sm:$0xf]
    %v1917 = vld [vmem:[#allocation15 + $0x14] sm:$0xf]
    %v1918 = vld [vmem:[#allocation15 + $0x18] sm:$0xf]
    %v1919 = vld [vmem:[#allocation15 + $0x1c] sm:$0xf]
    %v1920 = vld [vmem:[#allocation15 + $0x20] sm:$0xf]
    %v1921 = vld [vmem:[#allocation15 + $0x24] sm:$0xf]
    %v1922 = vld [vmem:[#allocation15 + $0x28] sm:$0xf]
    %v1923 = vld [vmem:[#allocation15 + $0x2c] sm:$0xf]
    %v1924 = vld [vmem:[#allocation15 + $0x30] sm:$0xf]
    %v1925 = vld [vmem:[#allocation15 + $0x34] sm:$0xf]
    %v1926 = vld [vmem:[#allocation15 + $0x38] sm:$0xf]
    %v1927 = vld [vmem:[#allocation15 + $0x3c] sm:$0xf]
    %v1928 = vld [vmem:[#allocation17] sm:$0x1]
    %v1930 = vlaneseq
    %v1931 = vshrl.u32 %v1930, 7
    %v1932 = vsub.s32 0, %v1931
    %v1933 = vrot.slane %v1928, %v1932
    %v1951 = vunpack.c.l.b16 %v1912
    %v1952 = vunpack.c.l.b16 %v1913
    %v1953 = vunpack.c.l.b16 %v1914
    %v1954 = vunpack.c.l.b16 %v1915
    %v1955 = vunpack.c.l.b16 %v1916
    %v1956 = vunpack.c.l.b16 %v1917
    %v1957 = vunpack.c.l.b16 %v1918
    %v1958 = vunpack.c.l.b16 %v1919
    %v1959 = vunpack.c.l.b16 %v1920
    %v1960 = vunpack.c.l.b16 %v1921
    %v1961 = vunpack.c.l.b16 %v1922
    %v1962 = vunpack.c.l.b16 %v1923
    %v1963 = vunpack.c.l.b16 %v1924
    %v1964 = vunpack.c.l.b16 %v1925
    %v1965 = vunpack.c.l.b16 %v1926
    %v1966 = vunpack.c.l.b16 %v1927
    %v1967 = vpack.c.b16 %v1952, %v1951
    %v1968 = vpack.c.b16 %v1954, %v1953
    %v1969 = vpack.c.b16 %v1956, %v1955
    %v1970 = vpack.c.b16 %v1958, %v1957
    %v1971 = vpack.c.b16 %v1960, %v1959
    %v1972 = vpack.c.b16 %v1962, %v1961
    %v1973 = vpack.c.b16 %v1964, %v1963
    %v1974 = vpack.c.b16 %v1966, %v1965
    %1983 = vmatprep.subr.bf16.mxu0 0
    %1984 = vmatpush1.bf16.msra.mxu0 %v1967
    %1985 = vmatprep.subr.bf16.mxu0 0
    %1986 = vmatpush1.bf16.msra.mxu0 %v1968
    %1987 = vmatprep.subr.bf16.mxu0 0
    %1988 = vmatpush1.bf16.msra.mxu0 %v1969
    %1989 = vmatprep.subr.bf16.mxu0 0
    %1990 = vmatpush1.bf16.msra.mxu0 %v1970
    %1991 = vmatprep.subr.bf16.mxu0 0
    %1992 = vmatpush1.bf16.msra.mxu0 %v1971
    %1993 = vmatprep.subr.bf16.mxu0 0
    %1994 = vmatpush1.bf16.msra.mxu0 %v1972
    %1995 = vmatprep.subr.bf16.mxu0 0
    %1996 = vmatpush1.bf16.msra.mxu0 %v1973
    %1997 = vmatprep.subr.bf16.mxu0 0
    %1998 = vmatpush1.bf16.msra.mxu0 %v1974
    %1999 = vmatprep.subr.bf16.mxu0 0
    %2000 = vmatpush1.bf16.msra.mxu0 0
    %2001 = vmatprep.subr.bf16.mxu0 0
    %2002 = vmatpush1.bf16.msra.mxu0 0
    %2003 = vmatprep.subr.bf16.mxu0 0
    %2004 = vmatpush1.bf16.msra.mxu0 0
    %2005 = vmatprep.subr.bf16.mxu0 0
    %2006 = vmatpush1.bf16.msra.mxu0 0
    %2007 = vmatprep.subr.bf16.mxu0 0
    %2008 = vmatpush1.bf16.msra.mxu0 0
    %2009 = vmatprep.subr.bf16.mxu0 0
    %2010 = vmatpush1.bf16.msra.mxu0 0
    %2011 = vmatprep.subr.bf16.mxu0 0
    %2012 = vmatpush1.bf16.msra.mxu0 0
    %2013 = vmatprep.subr.bf16.mxu0 0
    %2014 = vmatpush1.bf16.msra.mxu0 0
    %2015 = vmatprep.mubr.bf16.mxu0 0
    %2016 = vmatmul.mubr.bf16.gmra.mrb[0].mxu0 %v1911
    %v2017 = vpop.f32.mrb[0].mxu0
    %v2018 = vadd.f32 %v1933, %v2017
    %v2019 = vpop.f32.mrb[0].mxu0
    %v2020 = vpop.f32.mrb[0].mxu0
    %v2021 = vpop.f32.mrb[0].mxu0
    %2022 = vdwg.mxu0
    %v2023 = vmax.f32 %v2018, 0.0
    %v2024 = vpack.c.bf16 %v2023, %v2023
    %v2025 = vld [vmem:[#allocation18] sm:$0xf]
    %v2026 = vld [vmem:[#allocation18 + $0x4] sm:$0xf]
    %v2027 = vld [vmem:[#allocation18 + $0x8] sm:$0xf]
    %v2028 = vld [vmem:[#allocation18 + $0xc] sm:$0xf]
    %v2029 = vld [vmem:[#allocation18 + $0x10] sm:$0xf]
    %v2030 = vld [vmem:[#allocation18 + $0x14] sm:$0xf]
    %v2031 = vld [vmem:[#allocation18 + $0x18] sm:$0xf]
    %v2032 = vld [vmem:[#allocation18 + $0x1c] sm:$0xf]
    %v2033 = vld [vmem:[#allocation18 + $0x20] sm:$0xf]
    %v2034 = vld [vmem:[#allocation18 + $0x24] sm:$0xf]
    %v2035 = vld [vmem:[#allocation18 + $0x28] sm:$0xf]
    %v2036 = vld [vmem:[#allocation18 + $0x2c] sm:$0xf]
    %v2037 = vld [vmem:[#allocation18 + $0x30] sm:$0xf]
    %v2038 = vld [vmem:[#allocation18 + $0x34] sm:$0xf]
    %v2039 = vld [vmem:[#allocation18 + $0x38] sm:$0xf]
    %v2040 = vld [vmem:[#allocation18 + $0x3c] sm:$0xf]
    %v2057 = vunpack.c.l.b16 %v2025
    %v2058 = vunpack.c.l.b16 %v2026
    %v2059 = vunpack.c.l.b16 %v2027
    %v2060 = vunpack.c.l.b16 %v2028
    %v2061 = vunpack.c.l.b16 %v2029
    %v2062 = vunpack.c.l.b16 %v2030
    %v2063 = vunpack.c.l.b16 %v2031
    %v2064 = vunpack.c.l.b16 %v2032
    %v2065 = vunpack.c.l.b16 %v2033
    %v2066 = vunpack.c.l.b16 %v2034
    %v2067 = vunpack.c.l.b16 %v2035
    %v2068 = vunpack.c.l.b16 %v2036
    %v2069 = vunpack.c.l.b16 %v2037
    %v2070 = vunpack.c.l.b16 %v2038
    %v2071 = vunpack.c.l.b16 %v2039
    %v2072 = vunpack.c.l.b16 %v2040
    %v2073 = vpack.c.b16 %v2058, %v2057
    %v2074 = vpack.c.b16 %v2060, %v2059
    %v2075 = vpack.c.b16 %v2062, %v2061
    %v2076 = vpack.c.b16 %v2064, %v2063
    %v2077 = vpack.c.b16 %v2066, %v2065
    %v2078 = vpack.c.b16 %v2068, %v2067
    %v2079 = vpack.c.b16 %v2070, %v2069
    %v2080 = vpack.c.b16 %v2072, %v2071
    %2089 = vmatprep.subr.bf16.mxu0 0
    %2090 = vmatpush1.bf16.msra.mxu0 %v2073
    %2091 = vmatprep.subr.bf16.mxu0 0
    %2092 = vmatpush1.bf16.msra.mxu0 %v2074
    %2093 = vmatprep.subr.bf16.mxu0 0
    %2094 = vmatpush1.bf16.msra.mxu0 %v2075
    %2095 = vmatprep.subr.bf16.mxu0 0
    %2096 = vmatpush1.bf16.msra.mxu0 %v2076
    %2097 = vmatprep.subr.bf16.mxu0 0
    %2098 = vmatpush1.bf16.msra.mxu0 %v2077
    %2099 = vmatprep.subr.bf16.mxu0 0
    %2100 = vmatpush1.bf16.msra.mxu0 %v2078
    %2101 = vmatprep.subr.bf16.mxu0 0
    %2102 = vmatpush1.bf16.msra.mxu0 %v2079
    %2103 = vmatprep.subr.bf16.mxu0 0
    %2104 = vmatpush1.bf16.msra.mxu0 %v2080
    %2105 = vmatprep.subr.bf16.mxu0 0
    %2106 = vmatpush1.bf16.msra.mxu0 0
    %2107 = vmatprep.subr.bf16.mxu0 0
    %2108 = vmatpush1.bf16.msra.mxu0 0
    %2109 = vmatprep.subr.bf16.mxu0 0
    %2110 = vmatpush1.bf16.msra.mxu0 0
    %2111 = vmatprep.subr.bf16.mxu0 0
    %2112 = vmatpush1.bf16.msra.mxu0 0
    %2113 = vmatprep.subr.bf16.mxu0 0
    %2114 = vmatpush1.bf16.msra.mxu0 0
    %2115 = vmatprep.subr.bf16.mxu0 0
    %2116 = vmatpush1.bf16.msra.mxu0 0
    %2117 = vmatprep.subr.bf16.mxu0 0
    %2118 = vmatpush1.bf16.msra.mxu0 0
    %2119 = vmatprep.subr.bf16.mxu0 0
    %2120 = vmatpush1.bf16.msra.mxu0 0
    %2121 = vmatprep.mubr.bf16.mxu0 0
    %2122 = vmatmul.mubr.bf16.gmra.mrb[0].mxu0 %v2024
    %v2123 = vpop.f32.mrb[0].mxu0
    %v2124 = vadd.f32 0.0, %v2123
    %v2125 = vpop.f32.mrb[0].mxu0
    %v2126 = vpop.f32.mrb[0].mxu0
    %v2127 = vpop.f32.mrb[0].mxu0
    %2128 = vdwg.mxu0
    %v2129 = vadd.f32 %v2023, %v2124
    %v2130 = vld [vmem:[#allocation20] sm:$0x1]
    %v2132 = vlaneseq
    %v2133 = vshrl.u32 %v2132, 7
    %v2134 = vsub.s32 0, %v2133
    %v2135 = vrot.slane %v2130, %v2134
    %v2137 = vadd.f32 %v2129, %v2135
    %2138 = vst [vmem:[#allocation21] sm:$0x3] %v2137
    // Predicated region
    $region90: #{_fused_forward.1} parent=1 // pred_check
      _
    $region91: #{_fused_forward.1} parent=1 // pred_check_branch
      %2140 = sbr.rel (0) target = $region93
    $region92: #{_fused_forward.1} parent=1 // pred_region
      %s2142 = ssub.s32 32, 32
      %2143 = vsyncadd [#allocation5], %s2142
      %s2145 = sshll.u32 [#allocation21], 4
      %s2146 = int_to_ptr.vmem [resolvable:$true] %s2145
      %2148 = dma.vmem_to_hbm [thread:$0]  %s2146, 32, %s11, [#allocation5]
    $region93: #{_fused_forward.1} parent=1 // pred_fallthru
      _
    // Predicated region
    $region94: #{_fused_forward.1} parent=1 // pred_check
      _
    $region95: #{_fused_forward.1} parent=1 // pred_check_branch
      %2150 = sbr.rel (0) target = $region97
    $region96: #{_fused_forward.1} parent=1 // pred_region
      %2151 = dma.done [#allocation5], 32
    $region97: #{_fused_forward.1} parent=1 // pred_fallthru
      _
    %2152 = vsyncpa [#allocation4], 1
    %2153 = vsyncpa [#allocation7], 1
    %2154 = vsyncpa [#allocation10], 1
    %2155 = vsyncpa [#allocation13], 1
    %2156 = vsyncpa [#allocation16], 1
    %2157 = vsyncpa [#allocation19], 1
    %2158 = vsyncpa [#allocation5], 1

</llo_original>
